<compile_context>
chip_gen: v7x
topology: tpu7x:2x2x1
jax: 0.10.0
libtpu: 0.0.40
codegen_flags: <defaults>
</compile_context>

<pallas_src>
import functools

import jax
import jax.numpy as jnp
from jax import lax
from jax.experimental import pallas as pl
from jax.experimental.pallas import tpu as pltpu


def _mlp_kernel(x_ref, w0_ref, b0_ref, wh_ref, bh_ref, wf_ref, bf_ref, o_ref,
                h_ref, *, n_hidden):
    # Layer 0: Linear(input_dim -> dim) + ReLU.
    # bf16 operands, one deep MXU matmul, f32 accumulate; elementwise stays f32.
    h = jnp.dot(x_ref[...], w0_ref[...], preferred_element_type=jnp.float32)
    h_ref[...] = jnp.maximum(h + b0_ref[...], 0.0)

    # Hidden LinearBlocks: Linear(dim -> dim) + ReLU.
    # NH is a compile-time constant -> fully unrolled for LLO scheduler visibility.
    # Activation is staged in the f32 VMEM scratch to bound vreg pressure.
    def body(i, carry):
        y = jnp.dot(h_ref[...].astype(jnp.bfloat16), wh_ref[i],
                    preferred_element_type=jnp.float32)
        h_ref[...] = jnp.maximum(y + bh_ref[i], 0.0)
        return carry

    lax.fori_loop(0, n_hidden, body, 0, unroll=True)

    # Final layer: Linear(dim -> output_dim), no norm, no activation.
    y = jnp.dot(h_ref[...].astype(jnp.bfloat16), wf_ref[...],
                preferred_element_type=jnp.float32) + bf_ref[...]
    o_ref[...] = y.astype(o_ref.dtype)


def mlp_pallas(x, w0, b0, wh, bh, wf, bf, *, batch_tile=128):
    """x: (B, ...) -> flattened to (B, input_dim), like PyTorch x.view(B, -1)."""
    B = x.shape[0]
    x2d = x.reshape(B, -1)
    Din = x2d.shape[1]
    D = w0.shape[1]
    Dout = wf.shape[1]
    NH = wh.shape[0]          # n_blk - 2 hidden LinearBlocks
    assert NH >= 1, "this kernel assumes n_blk >= 3"
    assert batch_tile % 8 == 0, "batch_tile must be sublane-aligned (multiple of 8)"

    # Pad ragged batches up to a multiple of batch_tile; slice the output back.
    Bp = pl.cdiv(B, batch_tile) * batch_tile
    if Bp != B:
        x2d = jnp.pad(x2d, ((0, Bp - B), (0, 0)))

    # bf16 MXU operands (f32 accumulation in-kernel); biases remain f32.
    x_bf = x2d.astype(jnp.bfloat16)
    w0_bf = w0.astype(jnp.bfloat16)
    wh_bf = wh.astype(jnp.bfloat16)
    wf_bf = wf.astype(jnp.bfloat16)
    b0_f = b0.astype(jnp.float32).reshape(1, D)
    bh_f = bh.astype(jnp.float32).reshape(NH, 1, D)
    bf_f = bf.astype(jnp.float32).reshape(1, Dout)

    kernel = functools.partial(_mlp_kernel, n_hidden=NH)

    flops = 2 * Bp * (Din * D + NH * D * D + D * Dout)
    bytes_accessed = (x_bf.size + w0_bf.size + wh_bf.size + wf_bf.size) * 2 \
        + (b0_f.size + bh_f.size + bf_f.size) * 4 + Bp * Dout * 4

    # Grid-invariant weights/biases: constant index_map + single buffer (no 2x VMEM).
    def wspec(blk, imap):
        return pl.BlockSpec(blk, imap, pipeline_mode=pl.Buffered(1))

    out = pl.pallas_call(
        kernel,
        out_shape=jax.ShapeDtypeStruct((Bp, Dout), jnp.float32),
        grid_spec=pltpu.PrefetchScalarGridSpec(
            num_scalar_prefetch=0,
            grid=(Bp // batch_tile,),
            in_specs=[
                pl.BlockSpec((batch_tile, Din), lambda b: (b, 0)),
                wspec((Din, D), lambda b: (0, 0)),
                wspec((1, D), lambda b: (0, 0)),
                wspec((NH, D, D), lambda b: (0, 0, 0)),
                wspec((NH, 1, D), lambda b: (0, 0, 0)),
                wspec((D, Dout), lambda b: (0, 0)),
                wspec((1, Dout), lambda b: (0, 0)),
            ],
            out_specs=pl.BlockSpec((batch_tile, Dout), lambda b: (b, 0)),
            scratch_shapes=[pltpu.VMEM((batch_tile, D), jnp.float32)],
        ),
        compiler_params=pltpu.CompilerParams(
            dimension_semantics=("parallel",),       # shard batch across TCs (v7x)
            vmem_limit_bytes=48 * 1024 * 1024),      # fits v7x's 64 MiB; ample on v5e/v6e
        cost_estimate=pl.CostEstimate(
            flops=flops, transcendentals=0, bytes_accessed=bytes_accessed),
    )(x_bf, w0_bf, b0_f, wh_bf, bh_f, wf_bf, bf_f)

    return out[:B] if Bp != B else out


def mlp_ref(x, w0, b0, wh, bh, wf, bf, *, operand_dtype=None):
    """Pure-JAX reference matching PyTorch MLP (norm='none', activ='relu').

    With operand_dtype=jnp.bfloat16 it mirrors the kernel's MXU math
    (bf16 operands, f32 accumulation); with None it is full f32 precision.
    """
    def dot(a, b):
        if operand_dtype is not None:
            a = a.astype(operand_dtype)
            b = b.astype(operand_dtype)
        return jnp.dot(a, b, preferred_element_type=jnp.float32,
                       precision=lax.Precision.HIGHEST)

    h = x.reshape(x.shape[0], -1)
    h = jnp.maximum(dot(h, w0) + b0.reshape(1, -1), 0.0)
    for i in range(wh.shape[0]):
        h = jnp.maximum(dot(h, wh[i]) + bh[i].reshape(1, -1), 0.0)
    return dot(h, wf) + bf.reshape(1, -1)


if __name__ == "__main__":
    # x.view(B, -1) => input_dim = 4 * 16 * 16 = 1024; n_blk = 3 => one hidden block.
    # B=256 with batch_tile=128 gives 2 grid steps (exercises both TCs on v7x).
    B, C, Hs, Ws = 256, 4, 16, 16
    INPUT_DIM = C * Hs * Ws
    DIM = 128
    OUTPUT_DIM = 128
    N_BLK = 3

    key = jax.random.PRNGKey(0)
    kx, k0, kb0, kh, kbh, kf, kbf = jax.random.split(key, 7)

    x = jax.random.normal(kx, (B, C, Hs, Ws), dtype=jnp.float32)
    s0 = 1.0 / float(INPUT_DIM) ** 0.5
    sh = 1.0 / float(DIM) ** 0.5
    w0 = s0 * jax.random.normal(k0, (INPUT_DIM, DIM), dtype=jnp.float32)
    b0 = 0.1 * jax.random.normal(kb0, (1, DIM), dtype=jnp.float32)
    wh = sh * jax.random.normal(kh, (N_BLK - 2, DIM, DIM), dtype=jnp.float32)
    bh = 0.1 * jax.random.normal(kbh, (N_BLK - 2, 1, DIM), dtype=jnp.float32)
    wf = sh * jax.random.normal(kf, (DIM, OUTPUT_DIM), dtype=jnp.float32)
    bf = 0.1 * jax.random.normal(kbf, (1, OUTPUT_DIM), dtype=jnp.float32)

    out = jax.block_until_ready(mlp_pallas(x, w0, b0, wh, bh, wf, bf, batch_tile=128))

    # Tight check against a reference that matches the kernel's MXU math
    # (bf16 operands, f32 accumulation).
    ref_bf16 = jax.block_until_ready(
        mlp_ref(x, w0, b0, wh, bh, wf, bf, operand_dtype=jnp.bfloat16))
    err_bf16 = float(jnp.max(jnp.abs(out - ref_bf16)))
    assert err_bf16 < 2e-3, f"mismatch vs bf16-matched reference: {err_bf16}"

    # Looser sanity check against the full-f32 reference (bf16 operand rounding
    # over the Din=1024 contraction dominates this gap).
    ref_f32 = jax.block_until_ready(mlp_ref(x, w0, b0, wh, bh, wf, bf))
    err_f32 = float(jnp.max(jnp.abs(out - ref_f32)))
    assert err_f32 < 1e-1, f"mismatch vs f32 reference: {err_f32}"

    print("KERNEL_OK")
</pallas_src>

<mosaic_0001>
module attributes {stable_mosaic.version = 11 : i64} {
  func.func @_mlp_kernel(%arg0: i32, %arg1: memref<128x1024xbf16, #tpu.memory_space<vmem>>, %arg2: memref<1024x128xbf16, #tpu.memory_space<vmem>>, %arg3: memref<1x128xf32, #tpu.memory_space<vmem>>, %arg4: memref<1x128x128xbf16, #tpu.memory_space<vmem>>, %arg5: memref<1x1x128xf32, #tpu.memory_space<vmem>>, %arg6: memref<128x128xbf16, #tpu.memory_space<vmem>>, %arg7: memref<1x128xf32, #tpu.memory_space<vmem>>, %arg8: memref<128x128xf32, #tpu.memory_space<vmem>>, %arg9: memref<128x128xf32, #tpu.memory_space<vmem>>) attributes {dimension_semantics = [#tpu.dimension_semantics<parallel>], iteration_bounds = array<i64: 2>, scalar_prefetch = 0 : i64, scratch_operands = 1 : i64, tpu.core_type = #tpu.core_type<tc>, window_params = [{transform_indices = @transform_0, window_bounds = array<i64: 128, 1024>}, {pipeline_mode = #tpu.pipeline_mode<synchronous>, transform_indices = @transform_1, window_bounds = array<i64: 1024, 128>}, {pipeline_mode = #tpu.pipeline_mode<synchronous>, transform_indices = @transform_2, window_bounds = array<i64: 1, 128>}, {pipeline_mode = #tpu.pipeline_mode<synchronous>, transform_indices = @transform_3, window_bounds = array<i64: 1, 128, 128>}, {pipeline_mode = #tpu.pipeline_mode<synchronous>, transform_indices = @transform_4, window_bounds = array<i64: 1, 1, 128>}, {pipeline_mode = #tpu.pipeline_mode<synchronous>, transform_indices = @transform_5, window_bounds = array<i64: 128, 128>}, {pipeline_mode = #tpu.pipeline_mode<synchronous>, transform_indices = @transform_6, window_bounds = array<i64: 1, 128>}, {transform_indices = @transform_7, window_bounds = array<i64: 128, 128>}]} {
    %c0 = arith.constant 0 : index
    %c0_0 = arith.constant 0 : index
    %0 = vector.load %arg1[%c0, %c0_0] : memref<128x1024xbf16, #tpu.memory_space<vmem>>, vector<128x1024xbf16>
    %c0_1 = arith.constant 0 : index
    %c0_2 = arith.constant 0 : index
    %1 = vector.load %arg2[%c0_1, %c0_2] : memref<1024x128xbf16, #tpu.memory_space<vmem>>, vector<1024x128xbf16>
    %cst = arith.constant dense<0.000000e+00> : vector<128x128xf32>
    %2 = tpu.matmul %0, %1, %cst {dimension_numbers = #tpu.dot_dimension_numbers<[1], [0], [0], [1], [0, 0, 1, 1], [], []>} : vector<128x1024xbf16>, vector<1024x128xbf16>, vector<128x128xf32> -> vector<128x128xf32>
    %c0_3 = arith.constant 0 : index
    %c0_4 = arith.constant 0 : index
    %3 = vector.load %arg3[%c0_3, %c0_4] : memref<1x128xf32, #tpu.memory_space<vmem>>, vector<1x128xf32>
    %4 = vector.broadcast %3 : vector<1x128xf32> to vector<128x128xf32>
    %5 = arith.addf %2, %4 : vector<128x128xf32>
    %cst_5 = arith.constant 0.000000e+00 : f32
    %6 = vector.broadcast %cst_5 : f32 to vector<128x128xf32>
    %7 = arith.maximumf %5, %6 : vector<128x128xf32>
    %c0_6 = arith.constant 0 : index
    %c0_7 = arith.constant 0 : index
    %8 = vector.load %arg9[%c0_6, %c0_7] : memref<128x128xf32, #tpu.memory_space<vmem>>, vector<128x128xf32>
    tpu.vector_store %arg9[%c0_6, %c0_7], %7 {strides = array<i32>} : memref<128x128xf32, #tpu.memory_space<vmem>>, vector<128x128xf32>,
    %c0_i32 = arith.constant 0 : i32
    %c0_8 = arith.constant 0 : index
    %c0_9 = arith.constant 0 : index
    %9 = vector.load %arg9[%c0_8, %c0_9] : memref<128x128xf32, #tpu.memory_space<vmem>>, vector<128x128xf32>
    %10 = arith.truncf %9 : vector<128x128xf32> to vector<128x128xbf16>
    %11 = arith.index_cast %c0_i32 : i32 to index
    %c0_10 = arith.constant 0 : index
    %c0_11 = arith.constant 0 : index
    %12 = vector.load %arg4[%11, %c0_10, %c0_11] : memref<1x128x128xbf16, #tpu.memory_space<vmem>>, vector<1x128x128xbf16>
    %13 = vector.shape_cast %12 : vector<1x128x128xbf16> to vector<128x128xbf16>
    %cst_12 = arith.constant dense<0.000000e+00> : vector<128x128xf32>
    %14 = tpu.matmul %10, %13, %cst_12 {dimension_numbers = #tpu.dot_dimension_numbers<[1], [0], [0], [1], [0, 0, 1, 1], [], []>} : vector<128x128xbf16>, vector<128x128xbf16>, vector<128x128xf32> -> vector<128x128xf32>
    %15 = arith.index_cast %c0_i32 : i32 to index
    %c0_13 = arith.constant 0 : index
    %c0_14 = arith.constant 0 : index
    %16 = vector.load %arg5[%15, %c0_13, %c0_14] : memref<1x1x128xf32, #tpu.memory_space<vmem>>, vector<1x1x128xf32>
    %17 = vector.shape_cast %16 : vector<1x1x128xf32> to vector<1x128xf32>
    %18 = vector.broadcast %17 : vector<1x128xf32> to vector<128x128xf32>
    %19 = arith.addf %14, %18 : vector<128x128xf32>
    %cst_15 = arith.constant 0.000000e+00 : f32
    %20 = vector.broadcast %cst_15 : f32 to vector<128x128xf32>
    %21 = arith.maximumf %19, %20 : vector<128x128xf32>
    %c0_16 = arith.constant 0 : index
    %c0_17 = arith.constant 0 : index
    %22 = vector.load %arg9[%c0_16, %c0_17] : memref<128x128xf32, #tpu.memory_space<vmem>>, vector<128x128xf32>
    tpu.vector_store %arg9[%c0_16, %c0_17], %21 {strides = array<i32>} : memref<128x128xf32, #tpu.memory_space<vmem>>, vector<128x128xf32>,
    %c1_i32 = arith.constant 1 : i32
    %c0_18 = arith.constant 0 : index
    %c0_19 = arith.constant 0 : index
    %23 = vector.load %arg9[%c0_18, %c0_19] : memref<128x128xf32, #tpu.memory_space<vmem>>, vector<128x128xf32>
    %24 = arith.truncf %23 : vector<128x128xf32> to vector<128x128xbf16>
    %c0_20 = arith.constant 0 : index
    %c0_21 = arith.constant 0 : index
    %25 = vector.load %arg6[%c0_20, %c0_21] : memref<128x128xbf16, #tpu.memory_space<vmem>>, vector<128x128xbf16>
    %cst_22 = arith.constant dense<0.000000e+00> : vector<128x128xf32>
    %26 = tpu.matmul %24, %25, %cst_22 {dimension_numbers = #tpu.dot_dimension_numbers<[1], [0], [0], [1], [0, 0, 1, 1], [], []>} : vector<128x128xbf16>, vector<128x128xbf16>, vector<128x128xf32> -> vector<128x128xf32>
    %c0_23 = arith.constant 0 : index
    %c0_24 = arith.constant 0 : index
    %27 = vector.load %arg7[%c0_23, %c0_24] : memref<1x128xf32, #tpu.memory_space<vmem>>, vector<1x128xf32>
    %28 = vector.broadcast %27 : vector<1x128xf32> to vector<128x128xf32>
    %29 = arith.addf %26, %28 : vector<128x128xf32>
    %c0_25 = arith.constant 0 : index
    %c0_26 = arith.constant 0 : index
    %30 = vector.load %arg8[%c0_25, %c0_26] : memref<128x128xf32, #tpu.memory_space<vmem>>, vector<128x128xf32>
    tpu.vector_store %arg8[%c0_25, %c0_26], %29 {strides = array<i32>} : memref<128x128xf32, #tpu.memory_space<vmem>>, vector<128x128xf32>,
    return
  }
  func.func @transform_0(%arg0: i32) -> (i32, i32) {
    %c0_i32 = arith.constant 0 : i32
    %c0_i32_0 = arith.constant 0 : i32
    return %arg0, %c0_i32 : i32, i32
  }
  func.func @transform_1(%arg0: i32) -> (i32, i32) {
    %c0_i32 = arith.constant 0 : i32
    %c0_i32_0 = arith.constant 0 : i32
    %c0_i32_1 = arith.constant 0 : i32
    return %c0_i32, %c0_i32_0 : i32, i32
  }
  func.func @transform_2(%arg0: i32) -> (i32, i32) {
    %c0_i32 = arith.constant 0 : i32
    %c0_i32_0 = arith.constant 0 : i32
    %c0_i32_1 = arith.constant 0 : i32
    return %c0_i32, %c0_i32_0 : i32, i32
  }
  func.func @transform_3(%arg0: i32) -> (i32, i32, i32) {
    %c0_i32 = arith.constant 0 : i32
    %c0_i32_0 = arith.constant 0 : i32
    %c0_i32_1 = arith.constant 0 : i32
    %c0_i32_2 = arith.constant 0 : i32
    return %c0_i32, %c0_i32_0, %c0_i32_1 : i32, i32, i32
  }
  func.func @transform_4(%arg0: i32) -> (i32, i32, i32) {
    %c0_i32 = arith.constant 0 : i32
    %c0_i32_0 = arith.constant 0 : i32
    %c0_i32_1 = arith.constant 0 : i32
    %c0_i32_2 = arith.constant 0 : i32
    return %c0_i32, %c0_i32_0, %c0_i32_1 : i32, i32, i32
  }
  func.func @transform_5(%arg0: i32) -> (i32, i32) {
    %c0_i32 = arith.constant 0 : i32
    %c0_i32_0 = arith.constant 0 : i32
    %c0_i32_1 = arith.constant 0 : i32
    return %c0_i32, %c0_i32_0 : i32, i32
  }
  func.func @transform_6(%arg0: i32) -> (i32, i32) {
    %c0_i32 = arith.constant 0 : i32
    %c0_i32_0 = arith.constant 0 : i32
    %c0_i32_1 = arith.constant 0 : i32
    return %c0_i32, %c0_i32_0 : i32, i32
  }
  func.func @transform_7(%arg0: i32) -> (i32, i32) {
    %c0_i32 = arith.constant 0 : i32
    %c0_i32_0 = arith.constant 0 : i32
    return %arg0, %c0_i32 : i32, i32
  }
}

</mosaic_0001>

<llo_original>
// kernel: tpu_custom_call.1
$region0: #{tpu_custom_call.1}
  #allocation0 [shape = 'u32[]', space=smem, size = 0x4, offset = 0x4, fixed_abs, tag = 'smem constant byte address 0x4 - core index']
  #allocation1 [shape = 'u32[144,128]{1,0:T(1,128)}', space=vmem, size = 0x12000, scoped, tag = 'internal scratch']
  #allocation2 [shape = 'f32[128,128]{1,0:T(8,128)}', space=vmem, size = 0x10000, scoped, tag = 'scratch operand']
  %s0 = inlined_call_operand.hbm [shape: bf16[256,1024], index: 0, kind: input, shape index: {}]
  %s1 = inlined_call_operand.hbm [shape: bf16[1024,128], index: 1, kind: input, shape index: {}]
  %s2 = inlined_call_operand.vmem [shape: f32[1,128], index: 2, kind: input, shape index: {}]
  %s3 = inlined_call_operand.hbm [shape: bf16[1,128,128], index: 3, kind: input, shape index: {}]
  %s4 = inlined_call_operand.vmem [shape: f32[1,1,128], index: 4, kind: input, shape index: {}]
  %s5 = inlined_call_operand.hbm [shape: bf16[128,128], index: 5, kind: input, shape index: {}]
  %s6 = inlined_call_operand.vmem [shape: f32[1,128], index: 6, kind: input, shape index: {}]
  %s7 = inlined_call_operand.hbm [shape: f32[256,128], index: 7, kind: output, shape index: {}]
  %s8 = sld [smem:[#allocation0]]
  $region77: #{tpu_custom_call.1} parent=0
    _
  %s10 = ssub.s32 1, %s8
  %s11 = scalar_select 0, %s10, %s8
  $region1: #{tpu_custom_call.1} parent=0
    #allocation3 [shape = 'u8[524288]{0}', space=vmem, size = 0x80000, scoped, tag = 'input window, operand 0']
    #allocation4 [shape = 's32[2]{0}', space=sflag, size = 0x8, scoped, tag = 'scoped memory for tpu_custom_call.1']
    #allocation5 [shape = 's32[2]{0}', space=sflag, size = 0x8, scoped, tag = 'scoped memory for tpu_custom_call.1']
    #allocation6 [shape = 'u8[262144]{0}', space=vmem, size = 0x40000, scoped, tag = 'input window, operand 1, single buffered']
    #allocation7 [shape = 's32[1]{0}', space=sflag, size = 0x4, scoped, tag = 'scoped memory for tpu_custom_call.1']
    #allocation8 [shape = 'u8[32768]{0}', space=vmem, size = 0x8000, scoped, tag = 'input window, operand 3, single buffered']
    #allocation9 [shape = 'u8[32768]{0}', space=vmem, size = 0x8000, scoped, tag = 'input window, operand 5, single buffered']
    #allocation10 [shape = 's32[1]{0}', space=sflag, size = 0x4, scoped, tag = 'scoped memory for tpu_custom_call.1']
    #allocation11 [shape = 'u8[131072]{0}', space=vmem, size = 0x20000, scoped, tag = 'output window, operand 0']
    %12 = vsyncpa [#allocation4], 0
    %s13 = scalar_lea.sflag [#allocation4], 1
    %14 = vsyncpa %s13, 0
    %15 = vsyncpa [#allocation7], 0
    %16 = vsyncpa [#allocation10], 0
    %17 = vsyncpa [#allocation5], 0
    %s18 = scalar_lea.sflag [#allocation5], 1
    %19 = vsyncpa %s18, 0
    loop: start=0, step=1, limit=4
    $region2: #{tpu_custom_call.1} parent=1 // loop_pre_header
      _
    $region3: #{tpu_custom_call.1} parent=1 // loop_header
      %s21 = sphi 0, %s25
      %p22 = scmp.ge.s32.totalorder %s21, 4
      %s31 = sphi 0, %s33
      %s34 = sphi 0, %s31
      %s35 = sphi 0, %s34
      %s51 = sphi 0, %s35
      %s55 = sphi 0, %s55
      %s57 = sphi 0, %s55
      %s58 = sphi 0, %s57
      %s72 = sphi 0, %s58
      %s76 = sphi 0, %s76
      %s78 = sphi 0, %s76
      %s79 = sphi 0, %s78
      %s93 = sphi 0, %s79
      %s97 = sphi 0, %s97
      %s99 = sphi 0, %s97
      %s100 = sphi 0, %s99
      %s114 = sphi 0, %s100
      %s118 = sphi 0, %s118
      %s120 = sphi 0, %s118
      %s121 = sphi 0, %s120
      %s135 = sphi 0, %s121
      %s139 = sphi 0, %s139
      %s141 = sphi 0, %s139
      %s142 = sphi 0, %s141
      %s156 = sphi 0, %s142
      %s160 = sphi 0, %s160
      %s162 = sphi 0, %s160
      %s163 = sphi 0, %s162
      %s177 = sphi 0, %s163
      %s183 = sphi 0, %s185
      %s186 = sphi 0, %s183
      %s187 = sphi 0, %s186
      %s203 = sphi 0, %s187
    $region4: #{tpu_custom_call.1} parent=1 // loop_header_branch
      %24 = sbr.rel (%p22) target = $region8
    $region5: #{tpu_custom_call.1} parent=1 // loop_body
      %s26 = ssub.s32 %s21, 1
      %s27 = ssub.s32 %s21, 2
      %s28 = sadd.s32 %s21, 1
      %s29 = ssub.s32 %s21, %s28
      %p30 = scmp.eq.s32.totalorder %s29, 0
      %s32 = sadd.s32 %s31, 1
      %s33 = scalar_select %p30, %s31, %s32
      %p36 = pneg %p30
      %p37 = scmp.eq.s32.totalorder %s21, 1
      %p38 = por %p36, %p37
      %p39 = scmp.ne.s32.totalorder %s31, %s34
      %p40 = scmp.eq.s32.totalorder %s21, 0
      %p41 = por %p39, %p40
      %p42 = scmp.ne.s32.totalorder %s31, %s34
      %p43 = scmp.eq.s32.totalorder %s26, 1
      %p44 = por %p42, %p43
      %p45 = scmp.ne.s32.totalorder %s34, %s35
      %p46 = scmp.eq.s32.totalorder %s26, 0
      %p47 = por %p45, %p46
      %p48 = scmp.ne.s32.totalorder %s34, %s35
      %p49 = scmp.eq.s32.totalorder %s27, 1
      %p50 = por %p48, %p49
      %p52 = scmp.ne.s32.totalorder %s35, %s51
      %p53 = scmp.eq.s32.totalorder %s27, 0
      %p54 = por %p52, %p53
      %s56 = sadd.s32 %s55, 1
      %p59 = scmp.eq.s32.totalorder %s21, 1
      %p60 = scmp.ne.s32.totalorder %s55, %s57
      %p61 = scmp.eq.s32.totalorder %s21, 0
      %p62 = por %p60, %p61
      %p63 = scmp.ne.s32.totalorder %s55, %s57
      %p64 = scmp.eq.s32.totalorder %s26, 1
      %p65 = por %p63, %p64
      %p66 = scmp.ne.s32.totalorder %s57, %s58
      %p67 = scmp.eq.s32.totalorder %s26, 0
      %p68 = por %p66, %p67
      %p69 = scmp.ne.s32.totalorder %s57, %s58
      %p70 = scmp.eq.s32.totalorder %s27, 1
      %p71 = por %p69, %p70
      %p73 = scmp.ne.s32.totalorder %s58, %s72
      %p74 = scmp.eq.s32.totalorder %s27, 0
      %p75 = por %p73, %p74
      %s77 = sadd.s32 %s76, 1
      %p80 = scmp.eq.s32.totalorder %s21, 1
      %p81 = scmp.ne.s32.totalorder %s76, %s78
      %p82 = scmp.eq.s32.totalorder %s21, 0
      %p83 = por %p81, %p82
      %p84 = scmp.ne.s32.totalorder %s76, %s78
      %p85 = scmp.eq.s32.totalorder %s26, 1
      %p86 = por %p84, %p85
      %p87 = scmp.ne.s32.totalorder %s78, %s79
      %p88 = scmp.eq.s32.totalorder %s26, 0
      %p89 = por %p87, %p88
      %p90 = scmp.ne.s32.totalorder %s78, %s79
      %p91 = scmp.eq.s32.totalorder %s27, 1
      %p92 = por %p90, %p91
      %p94 = scmp.ne.s32.totalorder %s79, %s93
      %p95 = scmp.eq.s32.totalorder %s27, 0
      %p96 = por %p94, %p95
      %s98 = sadd.s32 %s97, 1
      %p101 = scmp.eq.s32.totalorder %s21, 1
      %p102 = scmp.ne.s32.totalorder %s97, %s99
      %p103 = scmp.eq.s32.totalorder %s21, 0
      %p104 = por %p102, %p103
      %p105 = scmp.ne.s32.totalorder %s97, %s99
      %p106 = scmp.eq.s32.totalorder %s26, 1
      %p107 = por %p105, %p106
      %p108 = scmp.ne.s32.totalorder %s99, %s100
      %p109 = scmp.eq.s32.totalorder %s26, 0
      %p110 = por %p108, %p109
      %p111 = scmp.ne.s32.totalorder %s99, %s100
      %p112 = scmp.eq.s32.totalorder %s27, 1
      %p113 = por %p111, %p112
      %p115 = scmp.ne.s32.totalorder %s100, %s114
      %p116 = scmp.eq.s32.totalorder %s27, 0
      %p117 = por %p115, %p116
      %s119 = sadd.s32 %s118, 1
      %p122 = scmp.eq.s32.totalorder %s21, 1
      %p123 = scmp.ne.s32.totalorder %s118, %s120
      %p124 = scmp.eq.s32.totalorder %s21, 0
      %p125 = por %p123, %p124
      %p126 = scmp.ne.s32.totalorder %s118, %s120
      %p127 = scmp.eq.s32.totalorder %s26, 1
      %p128 = por %p126, %p127
      %p129 = scmp.ne.s32.totalorder %s120, %s121
      %p130 = scmp.eq.s32.totalorder %s26, 0
      %p131 = por %p129, %p130
      %p132 = scmp.ne.s32.totalorder %s120, %s121
      %p133 = scmp.eq.s32.totalorder %s27, 1
      %p134 = por %p132, %p133
      %p136 = scmp.ne.s32.totalorder %s121, %s135
      %p137 = scmp.eq.s32.totalorder %s27, 0
      %p138 = por %p136, %p137
      %s140 = sadd.s32 %s139, 1
      %p143 = scmp.eq.s32.totalorder %s21, 1
      %p144 = scmp.ne.s32.totalorder %s139, %s141
      %p145 = scmp.eq.s32.totalorder %s21, 0
      %p146 = por %p144, %p145
      %p147 = scmp.ne.s32.totalorder %s139, %s141
      %p148 = scmp.eq.s32.totalorder %s26, 1
      %p149 = por %p147, %p148
      %p150 = scmp.ne.s32.totalorder %s141, %s142
      %p151 = scmp.eq.s32.totalorder %s26, 0
      %p152 = por %p150, %p151
      %p153 = scmp.ne.s32.totalorder %s141, %s142
      %p154 = scmp.eq.s32.totalorder %s27, 1
      %p155 = por %p153, %p154
      %p157 = scmp.ne.s32.totalorder %s142, %s156
      %p158 = scmp.eq.s32.totalorder %s27, 0
      %p159 = por %p157, %p158
      %s161 = sadd.s32 %s160, 1
      %p164 = scmp.eq.s32.totalorder %s21, 1
      %p165 = scmp.ne.s32.totalorder %s160, %s162
      %p166 = scmp.eq.s32.totalorder %s21, 0
      %p167 = por %p165, %p166
      %p168 = scmp.ne.s32.totalorder %s160, %s162
      %p169 = scmp.eq.s32.totalorder %s26, 1
      %p170 = por %p168, %p169
      %p171 = scmp.ne.s32.totalorder %s162, %s163
      %p172 = scmp.eq.s32.totalorder %s26, 0
      %p173 = por %p171, %p172
      %p174 = scmp.ne.s32.totalorder %s162, %s163
      %p175 = scmp.eq.s32.totalorder %s27, 1
      %p176 = por %p174, %p175
      %p178 = scmp.ne.s32.totalorder %s163, %s177
      %p179 = scmp.eq.s32.totalorder %s27, 0
      %p180 = por %p178, %p179
      %s181 = ssub.s32 %s21, %s28
      %p182 = scmp.eq.s32.totalorder %s181, 0
      %s184 = sadd.s32 %s183, 1
      %s185 = scalar_select %p182, %s183, %s184
      %p188 = pneg %p182
      %p189 = scmp.eq.s32.totalorder %s21, 1
      %p190 = por %p188, %p189
      %p191 = scmp.ne.s32.totalorder %s183, %s186
      %p192 = scmp.eq.s32.totalorder %s21, 0
      %p193 = por %p191, %p192
      %p194 = scmp.ne.s32.totalorder %s183, %s186
      %p195 = scmp.eq.s32.totalorder %s26, 1
      %p196 = por %p194, %p195
      %p197 = scmp.ne.s32.totalorder %s186, %s187
      %p198 = scmp.eq.s32.totalorder %s26, 0
      %p199 = por %p197, %p198
      %p200 = scmp.ne.s32.totalorder %s186, %s187
      %p201 = scmp.eq.s32.totalorder %s27, 1
      %p202 = por %p200, %p201
      %p204 = scmp.ne.s32.totalorder %s187, %s203
      %p205 = scmp.eq.s32.totalorder %s27, 0
      %p206 = por %p204, %p205
      %p207 = scmp.le.s32.totalorder 1, %s21
      %p208 = scmp.lt.s32.totalorder %s21, 3
      %p209 = pnand %p207, %p208
      %p210 = pneg %p209
      // Predicated region
      $region9: #{tpu_custom_call.1} parent=5 // pred_check
        _
      $region10: #{tpu_custom_call.1} parent=5 // pred_check_branch
        %212 = sbr.rel (%p209) target = $region12
      $region11: #{tpu_custom_call.1} parent=5 // pred_region
        %s213 = ssub.s32 %s21, 1
        // Predicated region
        $region13: #{tpu_custom_call.1} parent=11 // pred_check
          %p214 = pneg %p68
        $region14: #{tpu_custom_call.1} parent=11 // pred_check_branch
          %216 = sbr.rel (%p214) target = $region16
        $region15: #{tpu_custom_call.1} parent=11 // pred_region
          %s218 = ssub.s32 8192, 8192
          %219 = vsyncadd [#allocation7], %s218
          %s220 = sshll.u32 [#allocation6], 4
          %s221 = int_to_ptr.vmem [resolvable:$true] %s220
          %226 = dma.hbm_to_vmem [thread:$0]  %s1, 8192, %s221, [#allocation7], 64, 64, 4
        $region16: #{tpu_custom_call.1} parent=11 // pred_fallthru
          _
        // Predicated region
        $region17: #{tpu_custom_call.1} parent=11 // pred_check
          %p227 = pneg %p89
        $region18: #{tpu_custom_call.1} parent=11 // pred_check_branch
          %229 = sbr.rel (%p227) target = $region20
        $region19: #{tpu_custom_call.1} parent=11 // pred_region
          _
        $region20: #{tpu_custom_call.1} parent=11 // pred_fallthru
          _
        // Predicated region
        $region21: #{tpu_custom_call.1} parent=11 // pred_check
          %p230 = pneg %p110
        $region22: #{tpu_custom_call.1} parent=11 // pred_check_branch
          %232 = sbr.rel (%p230) target = $region24
        $region23: #{tpu_custom_call.1} parent=11 // pred_region
          %s234 = ssub.s32 1024, 1024
          %235 = vsyncadd [#allocation7], %s234
          %s236 = sshll.u32 [#allocation8], 4
          %s237 = int_to_ptr.vmem [resolvable:$true] %s236
          %242 = dma.hbm_to_vmem [thread:$0]  %s3, 1024, %s237, [#allocation7], 64, 64, 4
        $region24: #{tpu_custom_call.1} parent=11 // pred_fallthru
          _
        // Predicated region
        $region25: #{tpu_custom_call.1} parent=11 // pred_check
          %p243 = pneg %p131
        $region26: #{tpu_custom_call.1} parent=11 // pred_check_branch
          %245 = sbr.rel (%p243) target = $region28
        $region27: #{tpu_custom_call.1} parent=11 // pred_region
          _
        $region28: #{tpu_custom_call.1} parent=11 // pred_fallthru
          _
        // Predicated region
        $region29: #{tpu_custom_call.1} parent=11 // pred_check
          %p246 = pneg %p152
        $region30: #{tpu_custom_call.1} parent=11 // pred_check_branch
          %248 = sbr.rel (%p246) target = $region32
        $region31: #{tpu_custom_call.1} parent=11 // pred_region
          %s250 = ssub.s32 1024, 1024
          %251 = vsyncadd [#allocation10], %s250
          %s252 = sshll.u32 [#allocation9], 4
          %s253 = int_to_ptr.vmem [resolvable:$true] %s252
          %258 = dma.hbm_to_vmem [thread:$0]  %s5, 1024, %s253, [#allocation10], 64, 64, 4
        $region32: #{tpu_custom_call.1} parent=11 // pred_fallthru
          _
        // Predicated region
        $region33: #{tpu_custom_call.1} parent=11 // pred_check
          %p259 = pneg %p173
        $region34: #{tpu_custom_call.1} parent=11 // pred_check_branch
          %261 = sbr.rel (%p259) target = $region36
        $region35: #{tpu_custom_call.1} parent=11 // pred_region
          _
        $region36: #{tpu_custom_call.1} parent=11 // pred_fallthru
          _
      $region12: #{tpu_custom_call.1} parent=5 // pred_fallthru
        _
      %p262 = scmp.lt.s32.totalorder %s21, 2
      // Predicated region
      $region37: #{tpu_custom_call.1} parent=5 // pred_check
        %p263 = pneg %p262
      $region38: #{tpu_custom_call.1} parent=5 // pred_check_branch
        %265 = sbr.rel (%p263) target = $region40
      $region39: #{tpu_custom_call.1} parent=5 // pred_region
        // Predicated region
        $region41: #{tpu_custom_call.1} parent=39 // pred_check
          %p266 = pneg %p41
        $region42: #{tpu_custom_call.1} parent=39 // pred_check_branch
          %268 = sbr.rel (%p266) target = $region44
        $region43: #{tpu_custom_call.1} parent=39 // pred_region
          %s269 = sand.u32 %s31, 1
          %s270 = scalar_lea.sflag [#allocation4], %s269
          %s271 = sand.u32 %s31, 1
          %s272 = smul.addr %s271, 512
          %s273 = scalar_lea.vmem [#allocation3], %s272
          %s274 = smul.u32 16, %s21
          %s276 = ssub.s32 8192, 8192
          %277 = vsyncadd %s270, %s276
          %s278 = smul.addr %s274, 8
          %s279 = smul.addr %s278, 64
          %s280 = scalar_lea.hbm %s0, %s279
          %s281 = sshll.u32 %s273, 4
          %s282 = int_to_ptr.vmem [resolvable:$true] %s281
          %287 = dma.hbm_to_vmem [thread:$0]  %s280, 8192, %s282, %s270, 512, 512, 32
        $region44: #{tpu_custom_call.1} parent=39 // pred_fallthru
          _
      $region40: #{tpu_custom_call.1} parent=5 // pred_fallthru
        _
      %p288 = scmp.le.s32.totalorder 1, %s21
      %p289 = scmp.lt.s32.totalorder %s21, 3
      %p290 = pnand %p288, %p289
      %p291 = pneg %p290
      // Predicated region
      $region45: #{tpu_custom_call.1} parent=5 // pred_check
        _
      $region46: #{tpu_custom_call.1} parent=5 // pred_check_branch
        %293 = sbr.rel (%p290) target = $region48
      $region47: #{tpu_custom_call.1} parent=5 // pred_region
        %s294 = ssub.s32 %s21, 1
        %s295 = sand.u32 %s34, 1
        %s296 = scalar_lea.sflag [#allocation4], %s295
        %s297 = sand.u32 %s34, 1
        %s298 = smul.addr %s297, 512
        %s299 = scalar_lea.vmem [#allocation3], %s298
        // Predicated region
        $region49: #{tpu_custom_call.1} parent=47 // pred_check
          %p300 = pneg %p47
        $region50: #{tpu_custom_call.1} parent=47 // pred_check_branch
          %302 = sbr.rel (%p300) target = $region52
        $region51: #{tpu_custom_call.1} parent=47 // pred_region
          %303 = dma.done %s296, 8192
        $region52: #{tpu_custom_call.1} parent=47 // pred_fallthru
          _
        // Predicated region
        $region53: #{tpu_custom_call.1} parent=47 // pred_check
          %p304 = pneg %p68
        $region54: #{tpu_custom_call.1} parent=47 // pred_check_branch
          %306 = sbr.rel (%p304) target = $region56
        $region55: #{tpu_custom_call.1} parent=47 // pred_region
          %307 = dma.done [#allocation7], 8192
        $region56: #{tpu_custom_call.1} parent=47 // pred_fallthru
          _
        // Predicated region
        $region57: #{tpu_custom_call.1} parent=47 // pred_check
          %p308 = pneg %p110
        $region58: #{tpu_custom_call.1} parent=47 // pred_check_branch
          %310 = sbr.rel (%p308) target = $region60
        $region59: #{tpu_custom_call.1} parent=47 // pred_region
          %311 = dma.done [#allocation7], 1024
        $region60: #{tpu_custom_call.1} parent=47 // pred_fallthru
          _
        // Predicated region
        $region61: #{tpu_custom_call.1} parent=47 // pred_check
          %p312 = pneg %p152
        $region62: #{tpu_custom_call.1} parent=47 // pred_check_branch
          %314 = sbr.rel (%p312) target = $region64
        $region63: #{tpu_custom_call.1} parent=47 // pred_region
          %315 = dma.done [#allocation10], 1024
        $region64: #{tpu_custom_call.1} parent=47 // pred_fallthru
          _
        %s316 = sand.u32 %s34, 1
        %s317 = scalar_lea.sflag [#allocation4], %s316
        %s318 = sand.u32 %s34, 1
        %s319 = smul.addr %s318, 512
        %s320 = scalar_lea.vmem [#allocation3], %s319
        %p321 = pneg %p47
        %p322 = pneg %p44
        %p323 = pneg %p68
        %p324 = pneg %p65
        %p325 = pneg %p89
        %p326 = pneg %p86
        %p327 = pneg %p110
        %p328 = pneg %p107
        %p329 = pneg %p131
        %p330 = pneg %p128
        %p331 = pneg %p152
        %p332 = pneg %p149
        %p333 = pneg %p173
        %p334 = pneg %p170
        %p335 = pneg %p199
        %p336 = pneg %p196
        %s337 = sand.u32 %s186, 1
        %s338 = scalar_lea.sflag [#allocation5], %s337
        %s339 = sand.u32 %s186, 1
        %s340 = smul.addr %s339, 128
        %s341 = scalar_lea.vmem [#allocation11], %s340
        %s342 = smul.u32 16, %s26
        %s343 = smul.u32 16, %s26
        %v345 = vld [vmem:[%s299] sm:$0xff]
        %v346 = vld [vmem:[%s299 + $0x8] sm:$0xff]
        %v347 = vld [vmem:[%s299 + $0x10] sm:$0xff]
        %v348 = vld [vmem:[%s299 + $0x18] sm:$0xff]
        %v349 = vld [vmem:[%s299 + $0x20] sm:$0xff]
        %v350 = vld [vmem:[%s299 + $0x28] sm:$0xff]
        %v351 = vld [vmem:[%s299 + $0x30] sm:$0xff]
        %v352 = vld [vmem:[%s299 + $0x38] sm:$0xff]
        %v353 = vld [vmem:[%s299 + $0x40] sm:$0xff]
        %v354 = vld [vmem:[%s299 + $0x48] sm:$0xff]
        %v355 = vld [vmem:[%s299 + $0x50] sm:$0xff]
        %v356 = vld [vmem:[%s299 + $0x58] sm:$0xff]
        %v357 = vld [vmem:[%s299 + $0x60] sm:$0xff]
        %v358 = vld [vmem:[%s299 + $0x68] sm:$0xff]
        %v359 = vld [vmem:[%s299 + $0x70] sm:$0xff]
        %v360 = vld [vmem:[%s299 + $0x78] sm:$0xff]
        %v361 = vld [vmem:[%s299 + $0x80] sm:$0xff]
        %v362 = vld [vmem:[%s299 + $0x88] sm:$0xff]
        %v363 = vld [vmem:[%s299 + $0x90] sm:$0xff]
        %v364 = vld [vmem:[%s299 + $0x98] sm:$0xff]
        %v365 = vld [vmem:[%s299 + $0xa0] sm:$0xff]
        %v366 = vld [vmem:[%s299 + $0xa8] sm:$0xff]
        %v367 = vld [vmem:[%s299 + $0xb0] sm:$0xff]
        %v368 = vld [vmem:[%s299 + $0xb8] sm:$0xff]
        %v369 = vld [vmem:[%s299 + $0xc0] sm:$0xff]
        %v370 = vld [vmem:[%s299 + $0xc8] sm:$0xff]
        %v371 = vld [vmem:[%s299 + $0xd0] sm:$0xff]
        %v372 = vld [vmem:[%s299 + $0xd8] sm:$0xff]
        %v373 = vld [vmem:[%s299 + $0xe0] sm:$0xff]
        %v374 = vld [vmem:[%s299 + $0xe8] sm:$0xff]
        %v375 = vld [vmem:[%s299 + $0xf0] sm:$0xff]
        %v376 = vld [vmem:[%s299 + $0xf8] sm:$0xff]
        %v377 = vld [vmem:[%s299 + $0x100] sm:$0xff]
        %v378 = vld [vmem:[%s299 + $0x108] sm:$0xff]
        %v379 = vld [vmem:[%s299 + $0x110] sm:$0xff]
        %v380 = vld [vmem:[%s299 + $0x118] sm:$0xff]
        %v381 = vld [vmem:[%s299 + $0x120] sm:$0xff]
        %v382 = vld [vmem:[%s299 + $0x128] sm:$0xff]
        %v383 = vld [vmem:[%s299 + $0x130] sm:$0xff]
        %v384 = vld [vmem:[%s299 + $0x138] sm:$0xff]
        %v385 = vld [vmem:[%s299 + $0x140] sm:$0xff]
        %v386 = vld [vmem:[%s299 + $0x148] sm:$0xff]
        %v387 = vld [vmem:[%s299 + $0x150] sm:$0xff]
        %v388 = vld [vmem:[%s299 + $0x158] sm:$0xff]
        %v389 = vld [vmem:[%s299 + $0x160] sm:$0xff]
        %v390 = vld [vmem:[%s299 + $0x168] sm:$0xff]
        %v391 = vld [vmem:[%s299 + $0x170] sm:$0xff]
        %v392 = vld [vmem:[%s299 + $0x178] sm:$0xff]
        %v393 = vld [vmem:[%s299 + $0x180] sm:$0xff]
        %v394 = vld [vmem:[%s299 + $0x188] sm:$0xff]
        %v395 = vld [vmem:[%s299 + $0x190] sm:$0xff]
        %v396 = vld [vmem:[%s299 + $0x198] sm:$0xff]
        %v397 = vld [vmem:[%s299 + $0x1a0] sm:$0xff]
        %v398 = vld [vmem:[%s299 + $0x1a8] sm:$0xff]
        %v399 = vld [vmem:[%s299 + $0x1b0] sm:$0xff]
        %v400 = vld [vmem:[%s299 + $0x1b8] sm:$0xff]
        %v401 = vld [vmem:[%s299 + $0x1c0] sm:$0xff]
        %v402 = vld [vmem:[%s299 + $0x1c8] sm:$0xff]
        %v403 = vld [vmem:[%s299 + $0x1d0] sm:$0xff]
        %v404 = vld [vmem:[%s299 + $0x1d8] sm:$0xff]
        %v405 = vld [vmem:[%s299 + $0x1e0] sm:$0xff]
        %v406 = vld [vmem:[%s299 + $0x1e8] sm:$0xff]
        %v407 = vld [vmem:[%s299 + $0x1f0] sm:$0xff]
        %v408 = vld [vmem:[%s299 + $0x1f8] sm:$0xff]
        %v409 = vld [vmem:[#allocation6] sm:$0xf]
        %v410 = vld [vmem:[#allocation6 + $0x4] sm:$0xf]
        %v411 = vld [vmem:[#allocation6 + $0x8] sm:$0xf]
        %v412 = vld [vmem:[#allocation6 + $0xc] sm:$0xf]
        %v413 = vld [vmem:[#allocation6 + $0x10] sm:$0xf]
        %v414 = vld [vmem:[#allocation6 + $0x14] sm:$0xf]
        %v415 = vld [vmem:[#allocation6 + $0x18] sm:$0xf]
        %v416 = vld [vmem:[#allocation6 + $0x1c] sm:$0xf]
        %v417 = vld [vmem:[#allocation6 + $0x20] sm:$0xf]
        %v418 = vld [vmem:[#allocation6 + $0x24] sm:$0xf]
        %v419 = vld [vmem:[#allocation6 + $0x28] sm:$0xf]
        %v420 = vld [vmem:[#allocation6 + $0x2c] sm:$0xf]
        %v421 = vld [vmem:[#allocation6 + $0x30] sm:$0xf]
        %v422 = vld [vmem:[#allocation6 + $0x34] sm:$0xf]
        %v423 = vld [vmem:[#allocation6 + $0x38] sm:$0xf]
        %v424 = vld [vmem:[#allocation6 + $0x3c] sm:$0xf]
        %v425 = vld [vmem:[#allocation6 + $0x40] sm:$0xf]
        %v426 = vld [vmem:[#allocation6 + $0x44] sm:$0xf]
        %v427 = vld [vmem:[#allocation6 + $0x48] sm:$0xf]
        %v428 = vld [vmem:[#allocation6 + $0x4c] sm:$0xf]
        %v429 = vld [vmem:[#allocation6 + $0x50] sm:$0xf]
        %v430 = vld [vmem:[#allocation6 + $0x54] sm:$0xf]
        %v431 = vld [vmem:[#allocation6 + $0x58] sm:$0xf]
        %v432 = vld [vmem:[#allocation6 + $0x5c] sm:$0xf]
        %v433 = vld [vmem:[#allocation6 + $0x60] sm:$0xf]
        %v434 = vld [vmem:[#allocation6 + $0x64] sm:$0xf]
        %v435 = vld [vmem:[#allocation6 + $0x68] sm:$0xf]
        %v436 = vld [vmem:[#allocation6 + $0x6c] sm:$0xf]
        %v437 = vld [vmem:[#allocation6 + $0x70] sm:$0xf]
        %v438 = vld [vmem:[#allocation6 + $0x74] sm:$0xf]
        %v439 = vld [vmem:[#allocation6 + $0x78] sm:$0xf]
        %v440 = vld [vmem:[#allocation6 + $0x7c] sm:$0xf]
        %v441 = vld [vmem:[#allocation6 + $0x80] sm:$0xf]
        %v442 = vld [vmem:[#allocation6 + $0x84] sm:$0xf]
        %v443 = vld [vmem:[#allocation6 + $0x88] sm:$0xf]
        %v444 = vld [vmem:[#allocation6 + $0x8c] sm:$0xf]
        %v445 = vld [vmem:[#allocation6 + $0x90] sm:$0xf]
        %v446 = vld [vmem:[#allocation6 + $0x94] sm:$0xf]
        %v447 = vld [vmem:[#allocation6 + $0x98] sm:$0xf]
        %v448 = vld [vmem:[#allocation6 + $0x9c] sm:$0xf]
        %v449 = vld [vmem:[#allocation6 + $0xa0] sm:$0xf]
        %v450 = vld [vmem:[#allocation6 + $0xa4] sm:$0xf]
        %v451 = vld [vmem:[#allocation6 + $0xa8] sm:$0xf]
        %v452 = vld [vmem:[#allocation6 + $0xac] sm:$0xf]
        %v453 = vld [vmem:[#allocation6 + $0xb0] sm:$0xf]
        %v454 = vld [vmem:[#allocation6 + $0xb4] sm:$0xf]
        %v455 = vld [vmem:[#allocation6 + $0xb8] sm:$0xf]
        %v456 = vld [vmem:[#allocation6 + $0xbc] sm:$0xf]
        %v457 = vld [vmem:[#allocation6 + $0xc0] sm:$0xf]
        %v458 = vld [vmem:[#allocation6 + $0xc4] sm:$0xf]
        %v459 = vld [vmem:[#allocation6 + $0xc8] sm:$0xf]
        %v460 = vld [vmem:[#allocation6 + $0xcc] sm:$0xf]
        %v461 = vld [vmem:[#allocation6 + $0xd0] sm:$0xf]
        %v462 = vld [vmem:[#allocation6 + $0xd4] sm:$0xf]
        %v463 = vld [vmem:[#allocation6 + $0xd8] sm:$0xf]
        %v464 = vld [vmem:[#allocation6 + $0xdc] sm:$0xf]
        %v465 = vld [vmem:[#allocation6 + $0xe0] sm:$0xf]
        %v466 = vld [vmem:[#allocation6 + $0xe4] sm:$0xf]
        %v467 = vld [vmem:[#allocation6 + $0xe8] sm:$0xf]
        %v468 = vld [vmem:[#allocation6 + $0xec] sm:$0xf]
        %v469 = vld [vmem:[#allocation6 + $0xf0] sm:$0xf]
        %v470 = vld [vmem:[#allocation6 + $0xf4] sm:$0xf]
        %v471 = vld [vmem:[#allocation6 + $0xf8] sm:$0xf]
        %v472 = vld [vmem:[#allocation6 + $0xfc] sm:$0xf]
        %v473 = vld [vmem:[#allocation6 + $0x100] sm:$0xf]
        %v474 = vld [vmem:[#allocation6 + $0x104] sm:$0xf]
        %v475 = vld [vmem:[#allocation6 + $0x108] sm:$0xf]
        %v476 = vld [vmem:[#allocation6 + $0x10c] sm:$0xf]
        %v477 = vld [vmem:[#allocation6 + $0x110] sm:$0xf]
        %v478 = vld [vmem:[#allocation6 + $0x114] sm:$0xf]
        %v479 = vld [vmem:[#allocation6 + $0x118] sm:$0xf]
        %v480 = vld [vmem:[#allocation6 + $0x11c] sm:$0xf]
        %v481 = vld [vmem:[#allocation6 + $0x120] sm:$0xf]
        %v482 = vld [vmem:[#allocation6 + $0x124] sm:$0xf]
        %v483 = vld [vmem:[#allocation6 + $0x128] sm:$0xf]
        %v484 = vld [vmem:[#allocation6 + $0x12c] sm:$0xf]
        %v485 = vld [vmem:[#allocation6 + $0x130] sm:$0xf]
        %v486 = vld [vmem:[#allocation6 + $0x134] sm:$0xf]
        %v487 = vld [vmem:[#allocation6 + $0x138] sm:$0xf]
        %v488 = vld [vmem:[#allocation6 + $0x13c] sm:$0xf]
        %v489 = vld [vmem:[#allocation6 + $0x140] sm:$0xf]
        %v490 = vld [vmem:[#allocation6 + $0x144] sm:$0xf]
        %v491 = vld [vmem:[#allocation6 + $0x148] sm:$0xf]
        %v492 = vld [vmem:[#allocation6 + $0x14c] sm:$0xf]
        %v493 = vld [vmem:[#allocation6 + $0x150] sm:$0xf]
        %v494 = vld [vmem:[#allocation6 + $0x154] sm:$0xf]
        %v495 = vld [vmem:[#allocation6 + $0x158] sm:$0xf]
        %v496 = vld [vmem:[#allocation6 + $0x15c] sm:$0xf]
        %v497 = vld [vmem:[#allocation6 + $0x160] sm:$0xf]
        %v498 = vld [vmem:[#allocation6 + $0x164] sm:$0xf]
        %v499 = vld [vmem:[#allocation6 + $0x168] sm:$0xf]
        %v500 = vld [vmem:[#allocation6 + $0x16c] sm:$0xf]
        %v501 = vld [vmem:[#allocation6 + $0x170] sm:$0xf]
        %v502 = vld [vmem:[#allocation6 + $0x174] sm:$0xf]
        %v503 = vld [vmem:[#allocation6 + $0x178] sm:$0xf]
        %v504 = vld [vmem:[#allocation6 + $0x17c] sm:$0xf]
        %v505 = vld [vmem:[#allocation6 + $0x180] sm:$0xf]
        %v506 = vld [vmem:[#allocation6 + $0x184] sm:$0xf]
        %v507 = vld [vmem:[#allocation6 + $0x188] sm:$0xf]
        %v508 = vld [vmem:[#allocation6 + $0x18c] sm:$0xf]
        %v509 = vld [vmem:[#allocation6 + $0x190] sm:$0xf]
        %v510 = vld [vmem:[#allocation6 + $0x194] sm:$0xf]
        %v511 = vld [vmem:[#allocation6 + $0x198] sm:$0xf]
        %v512 = vld [vmem:[#allocation6 + $0x19c] sm:$0xf]
        %v513 = vld [vmem:[#allocation6 + $0x1a0] sm:$0xf]
        %v514 = vld [vmem:[#allocation6 + $0x1a4] sm:$0xf]
        %v515 = vld [vmem:[#allocation6 + $0x1a8] sm:$0xf]
        %v516 = vld [vmem:[#allocation6 + $0x1ac] sm:$0xf]
        %v517 = vld [vmem:[#allocation6 + $0x1b0] sm:$0xf]
        %v518 = vld [vmem:[#allocation6 + $0x1b4] sm:$0xf]
        %v519 = vld [vmem:[#allocation6 + $0x1b8] sm:$0xf]
        %v520 = vld [vmem:[#allocation6 + $0x1bc] sm:$0xf]
        %v521 = vld [vmem:[#allocation6 + $0x1c0] sm:$0xf]
        %v522 = vld [vmem:[#allocation6 + $0x1c4] sm:$0xf]
        %v523 = vld [vmem:[#allocation6 + $0x1c8] sm:$0xf]
        %v524 = vld [vmem:[#allocation6 + $0x1cc] sm:$0xf]
        %v525 = vld [vmem:[#allocation6 + $0x1d0] sm:$0xf]
        %v526 = vld [vmem:[#allocation6 + $0x1d4] sm:$0xf]
        %v527 = vld [vmem:[#allocation6 + $0x1d8] sm:$0xf]
        %v528 = vld [vmem:[#allocation6 + $0x1dc] sm:$0xf]
        %v529 = vld [vmem:[#allocation6 + $0x1e0] sm:$0xf]
        %v530 = vld [vmem:[#allocation6 + $0x1e4] sm:$0xf]
        %v531 = vld [vmem:[#allocation6 + $0x1e8] sm:$0xf]
        %v532 = vld [vmem:[#allocation6 + $0x1ec] sm:$0xf]
        %v533 = vld [vmem:[#allocation6 + $0x1f0] sm:$0xf]
        %v534 = vld [vmem:[#allocation6 + $0x1f4] sm:$0xf]
        %v535 = vld [vmem:[#allocation6 + $0x1f8] sm:$0xf]
        %v536 = vld [vmem:[#allocation6 + $0x1fc] sm:$0xf]
        %v537 = vld [vmem:[%s2] sm:$0x1]
        %v539 = vlaneseq
        %v540 = vshrl.u32 %v539, 7
        %v541 = vsub.s32 0, %v540
        %v542 = vrot.slane %v537, %v541
        %v608 = vunpack.c.l.b16 %v345
        %v609 = vunpack.c.h.b16 %v345
        %v610 = vunpack.c.l.b16 %v346
        %v611 = vunpack.c.h.b16 %v346
        %v612 = vunpack.c.l.b16 %v347
        %v613 = vunpack.c.h.b16 %v347
        %v614 = vunpack.c.l.b16 %v348
        %v615 = vunpack.c.h.b16 %v348
        %v616 = vunpack.c.l.b16 %v349
        %v617 = vunpack.c.h.b16 %v349
        %v618 = vunpack.c.l.b16 %v350
        %v619 = vunpack.c.h.b16 %v350
        %v620 = vunpack.c.l.b16 %v351
        %v621 = vunpack.c.h.b16 %v351
        %v622 = vunpack.c.l.b16 %v352
        %v623 = vunpack.c.h.b16 %v352
        %v624 = vunpack.c.l.b16 %v353
        %v625 = vunpack.c.h.b16 %v353
        %v626 = vunpack.c.l.b16 %v354
        %v627 = vunpack.c.h.b16 %v354
        %v628 = vunpack.c.l.b16 %v355
        %v629 = vunpack.c.h.b16 %v355
        %v630 = vunpack.c.l.b16 %v356
        %v631 = vunpack.c.h.b16 %v356
        %v632 = vunpack.c.l.b16 %v357
        %v633 = vunpack.c.h.b16 %v357
        %v634 = vunpack.c.l.b16 %v358
        %v635 = vunpack.c.h.b16 %v358
        %v636 = vunpack.c.l.b16 %v359
        %v637 = vunpack.c.h.b16 %v359
        %v638 = vunpack.c.l.b16 %v360
        %v639 = vunpack.c.h.b16 %v360
        %v640 = vunpack.c.l.b16 %v361
        %v641 = vunpack.c.h.b16 %v361
        %v642 = vunpack.c.l.b16 %v362
        %v643 = vunpack.c.h.b16 %v362
        %v644 = vunpack.c.l.b16 %v363
        %v645 = vunpack.c.h.b16 %v363
        %v646 = vunpack.c.l.b16 %v364
        %v647 = vunpack.c.h.b16 %v364
        %v648 = vunpack.c.l.b16 %v365
        %v649 = vunpack.c.h.b16 %v365
        %v650 = vunpack.c.l.b16 %v366
        %v651 = vunpack.c.h.b16 %v366
        %v652 = vunpack.c.l.b16 %v367
        %v653 = vunpack.c.h.b16 %v367
        %v654 = vunpack.c.l.b16 %v368
        %v655 = vunpack.c.h.b16 %v368
        %v656 = vunpack.c.l.b16 %v369
        %v657 = vunpack.c.h.b16 %v369
        %v658 = vunpack.c.l.b16 %v370
        %v659 = vunpack.c.h.b16 %v370
        %v660 = vunpack.c.l.b16 %v371
        %v661 = vunpack.c.h.b16 %v371
        %v662 = vunpack.c.l.b16 %v372
        %v663 = vunpack.c.h.b16 %v372
        %v664 = vunpack.c.l.b16 %v373
        %v665 = vunpack.c.h.b16 %v373
        %v666 = vunpack.c.l.b16 %v374
        %v667 = vunpack.c.h.b16 %v374
        %v668 = vunpack.c.l.b16 %v375
        %v669 = vunpack.c.h.b16 %v375
        %v670 = vunpack.c.l.b16 %v376
        %v671 = vunpack.c.h.b16 %v376
        %v672 = vunpack.c.l.b16 %v377
        %v673 = vunpack.c.h.b16 %v377
        %v674 = vunpack.c.l.b16 %v378
        %v675 = vunpack.c.h.b16 %v378
        %v676 = vunpack.c.l.b16 %v379
        %v677 = vunpack.c.h.b16 %v379
        %v678 = vunpack.c.l.b16 %v380
        %v679 = vunpack.c.h.b16 %v380
        %v680 = vunpack.c.l.b16 %v381
        %v681 = vunpack.c.h.b16 %v381
        %v682 = vunpack.c.l.b16 %v382
        %v683 = vunpack.c.h.b16 %v382
        %v684 = vunpack.c.l.b16 %v383
        %v685 = vunpack.c.h.b16 %v383
        %v686 = vunpack.c.l.b16 %v384
        %v687 = vunpack.c.h.b16 %v384
        %v688 = vunpack.c.l.b16 %v385
        %v689 = vunpack.c.h.b16 %v385
        %v690 = vunpack.c.l.b16 %v386
        %v691 = vunpack.c.h.b16 %v386
        %v692 = vunpack.c.l.b16 %v387
        %v693 = vunpack.c.h.b16 %v387
        %v694 = vunpack.c.l.b16 %v388
        %v695 = vunpack.c.h.b16 %v388
        %v696 = vunpack.c.l.b16 %v389
        %v697 = vunpack.c.h.b16 %v389
        %v698 = vunpack.c.l.b16 %v390
        %v699 = vunpack.c.h.b16 %v390
        %v700 = vunpack.c.l.b16 %v391
        %v701 = vunpack.c.h.b16 %v391
        %v702 = vunpack.c.l.b16 %v392
        %v703 = vunpack.c.h.b16 %v392
        %v704 = vunpack.c.l.b16 %v393
        %v705 = vunpack.c.h.b16 %v393
        %v706 = vunpack.c.l.b16 %v394
        %v707 = vunpack.c.h.b16 %v394
        %v708 = vunpack.c.l.b16 %v395
        %v709 = vunpack.c.h.b16 %v395
        %v710 = vunpack.c.l.b16 %v396
        %v711 = vunpack.c.h.b16 %v396
        %v712 = vunpack.c.l.b16 %v397
        %v713 = vunpack.c.h.b16 %v397
        %v714 = vunpack.c.l.b16 %v398
        %v715 = vunpack.c.h.b16 %v398
        %v716 = vunpack.c.l.b16 %v399
        %v717 = vunpack.c.h.b16 %v399
        %v718 = vunpack.c.l.b16 %v400
        %v719 = vunpack.c.h.b16 %v400
        %v720 = vunpack.c.l.b16 %v401
        %v721 = vunpack.c.h.b16 %v401
        %v722 = vunpack.c.l.b16 %v402
        %v723 = vunpack.c.h.b16 %v402
        %v724 = vunpack.c.l.b16 %v403
        %v725 = vunpack.c.h.b16 %v403
        %v726 = vunpack.c.l.b16 %v404
        %v727 = vunpack.c.h.b16 %v404
        %v728 = vunpack.c.l.b16 %v405
        %v729 = vunpack.c.h.b16 %v405
        %v730 = vunpack.c.l.b16 %v406
        %v731 = vunpack.c.h.b16 %v406
        %v732 = vunpack.c.l.b16 %v407
        %v733 = vunpack.c.h.b16 %v407
        %v734 = vunpack.c.l.b16 %v408
        %v735 = vunpack.c.h.b16 %v408
        %v736 = vpack.c.b16 %v616, %v608
        %v737 = vpack.c.b16 %v617, %v609
        %v738 = vpack.c.b16 %v618, %v610
        %v739 = vpack.c.b16 %v619, %v611
        %v740 = vpack.c.b16 %v620, %v612
        %v741 = vpack.c.b16 %v621, %v613
        %v742 = vpack.c.b16 %v622, %v614
        %v743 = vpack.c.b16 %v623, %v615
        %v744 = vpack.c.b16 %v632, %v624
        %v745 = vpack.c.b16 %v633, %v625
        %v746 = vpack.c.b16 %v634, %v626
        %v747 = vpack.c.b16 %v635, %v627
        %v748 = vpack.c.b16 %v636, %v628
        %v749 = vpack.c.b16 %v637, %v629
        %v750 = vpack.c.b16 %v638, %v630
        %v751 = vpack.c.b16 %v639, %v631
        %v752 = vpack.c.b16 %v648, %v640
        %v753 = vpack.c.b16 %v649, %v641
        %v754 = vpack.c.b16 %v650, %v642
        %v755 = vpack.c.b16 %v651, %v643
        %v756 = vpack.c.b16 %v652, %v644
        %v757 = vpack.c.b16 %v653, %v645
        %v758 = vpack.c.b16 %v654, %v646
        %v759 = vpack.c.b16 %v655, %v647
        %v760 = vpack.c.b16 %v664, %v656
        %v761 = vpack.c.b16 %v665, %v657
        %v762 = vpack.c.b16 %v666, %v658
        %v763 = vpack.c.b16 %v667, %v659
        %v764 = vpack.c.b16 %v668, %v660
        %v765 = vpack.c.b16 %v669, %v661
        %v766 = vpack.c.b16 %v670, %v662
        %v767 = vpack.c.b16 %v671, %v663
        %v768 = vpack.c.b16 %v680, %v672
        %v769 = vpack.c.b16 %v681, %v673
        %v770 = vpack.c.b16 %v682, %v674
        %v771 = vpack.c.b16 %v683, %v675
        %v772 = vpack.c.b16 %v684, %v676
        %v773 = vpack.c.b16 %v685, %v677
        %v774 = vpack.c.b16 %v686, %v678
        %v775 = vpack.c.b16 %v687, %v679
        %v776 = vpack.c.b16 %v696, %v688
        %v777 = vpack.c.b16 %v697, %v689
        %v778 = vpack.c.b16 %v698, %v690
        %v779 = vpack.c.b16 %v699, %v691
        %v780 = vpack.c.b16 %v700, %v692
        %v781 = vpack.c.b16 %v701, %v693
        %v782 = vpack.c.b16 %v702, %v694
        %v783 = vpack.c.b16 %v703, %v695
        %v784 = vpack.c.b16 %v712, %v704
        %v785 = vpack.c.b16 %v713, %v705
        %v786 = vpack.c.b16 %v714, %v706
        %v787 = vpack.c.b16 %v715, %v707
        %v788 = vpack.c.b16 %v716, %v708
        %v789 = vpack.c.b16 %v717, %v709
        %v790 = vpack.c.b16 %v718, %v710
        %v791 = vpack.c.b16 %v719, %v711
        %v792 = vpack.c.b16 %v728, %v720
        %v793 = vpack.c.b16 %v729, %v721
        %v794 = vpack.c.b16 %v730, %v722
        %v795 = vpack.c.b16 %v731, %v723
        %v796 = vpack.c.b16 %v732, %v724
        %v797 = vpack.c.b16 %v733, %v725
        %v798 = vpack.c.b16 %v734, %v726
        %v799 = vpack.c.b16 %v735, %v727
        %v992 = vunpack.c.l.b16 %v409
        %v993 = vunpack.c.l.b16 %v410
        %v994 = vunpack.c.l.b16 %v411
        %v995 = vunpack.c.l.b16 %v412
        %v996 = vunpack.c.l.b16 %v413
        %v997 = vunpack.c.l.b16 %v414
        %v998 = vunpack.c.l.b16 %v415
        %v999 = vunpack.c.l.b16 %v416
        %v1000 = vunpack.c.l.b16 %v417
        %v1001 = vunpack.c.l.b16 %v418
        %v1002 = vunpack.c.l.b16 %v419
        %v1003 = vunpack.c.l.b16 %v420
        %v1004 = vunpack.c.l.b16 %v421
        %v1005 = vunpack.c.l.b16 %v422
        %v1006 = vunpack.c.l.b16 %v423
        %v1007 = vunpack.c.l.b16 %v424
        %v1008 = vunpack.c.l.b16 %v425
        %v1009 = vunpack.c.l.b16 %v426
        %v1010 = vunpack.c.l.b16 %v427
        %v1011 = vunpack.c.l.b16 %v428
        %v1012 = vunpack.c.l.b16 %v429
        %v1013 = vunpack.c.l.b16 %v430
        %v1014 = vunpack.c.l.b16 %v431
        %v1015 = vunpack.c.l.b16 %v432
        %v1016 = vunpack.c.l.b16 %v433
        %v1017 = vunpack.c.l.b16 %v434
        %v1018 = vunpack.c.l.b16 %v435
        %v1019 = vunpack.c.l.b16 %v436
        %v1020 = vunpack.c.l.b16 %v437
        %v1021 = vunpack.c.l.b16 %v438
        %v1022 = vunpack.c.l.b16 %v439
        %v1023 = vunpack.c.l.b16 %v440
        %v1024 = vunpack.c.l.b16 %v441
        %v1025 = vunpack.c.l.b16 %v442
        %v1026 = vunpack.c.l.b16 %v443
        %v1027 = vunpack.c.l.b16 %v444
        %v1028 = vunpack.c.l.b16 %v445
        %v1029 = vunpack.c.l.b16 %v446
        %v1030 = vunpack.c.l.b16 %v447
        %v1031 = vunpack.c.l.b16 %v448
        %v1032 = vunpack.c.l.b16 %v449
        %v1033 = vunpack.c.l.b16 %v450
        %v1034 = vunpack.c.l.b16 %v451
        %v1035 = vunpack.c.l.b16 %v452
        %v1036 = vunpack.c.l.b16 %v453
        %v1037 = vunpack.c.l.b16 %v454
        %v1038 = vunpack.c.l.b16 %v455
        %v1039 = vunpack.c.l.b16 %v456
        %v1040 = vunpack.c.l.b16 %v457
        %v1041 = vunpack.c.l.b16 %v458
        %v1042 = vunpack.c.l.b16 %v459
        %v1043 = vunpack.c.l.b16 %v460
        %v1044 = vunpack.c.l.b16 %v461
        %v1045 = vunpack.c.l.b16 %v462
        %v1046 = vunpack.c.l.b16 %v463
        %v1047 = vunpack.c.l.b16 %v464
        %v1048 = vunpack.c.l.b16 %v465
        %v1049 = vunpack.c.l.b16 %v466
        %v1050 = vunpack.c.l.b16 %v467
        %v1051 = vunpack.c.l.b16 %v468
        %v1052 = vunpack.c.l.b16 %v469
        %v1053 = vunpack.c.l.b16 %v470
        %v1054 = vunpack.c.l.b16 %v471
        %v1055 = vunpack.c.l.b16 %v472
        %v1056 = vunpack.c.l.b16 %v473
        %v1057 = vunpack.c.l.b16 %v474
        %v1058 = vunpack.c.l.b16 %v475
        %v1059 = vunpack.c.l.b16 %v476
        %v1060 = vunpack.c.l.b16 %v477
        %v1061 = vunpack.c.l.b16 %v478
        %v1062 = vunpack.c.l.b16 %v479
        %v1063 = vunpack.c.l.b16 %v480
        %v1064 = vunpack.c.l.b16 %v481
        %v1065 = vunpack.c.l.b16 %v482
        %v1066 = vunpack.c.l.b16 %v483
        %v1067 = vunpack.c.l.b16 %v484
        %v1068 = vunpack.c.l.b16 %v485
        %v1069 = vunpack.c.l.b16 %v486
        %v1070 = vunpack.c.l.b16 %v487
        %v1071 = vunpack.c.l.b16 %v488
        %v1072 = vunpack.c.l.b16 %v489
        %v1073 = vunpack.c.l.b16 %v490
        %v1074 = vunpack.c.l.b16 %v491
        %v1075 = vunpack.c.l.b16 %v492
        %v1076 = vunpack.c.l.b16 %v493
        %v1077 = vunpack.c.l.b16 %v494
        %v1078 = vunpack.c.l.b16 %v495
        %v1079 = vunpack.c.l.b16 %v496
        %v1080 = vunpack.c.l.b16 %v497
        %v1081 = vunpack.c.l.b16 %v498
        %v1082 = vunpack.c.l.b16 %v499
        %v1083 = vunpack.c.l.b16 %v500
        %v1084 = vunpack.c.l.b16 %v501
        %v1085 = vunpack.c.l.b16 %v502
        %v1086 = vunpack.c.l.b16 %v503
        %v1087 = vunpack.c.l.b16 %v504
        %v1088 = vunpack.c.l.b16 %v505
        %v1089 = vunpack.c.l.b16 %v506
        %v1090 = vunpack.c.l.b16 %v507
        %v1091 = vunpack.c.l.b16 %v508
        %v1092 = vunpack.c.l.b16 %v509
        %v1093 = vunpack.c.l.b16 %v510
        %v1094 = vunpack.c.l.b16 %v511
        %v1095 = vunpack.c.l.b16 %v512
        %v1096 = vunpack.c.l.b16 %v513
        %v1097 = vunpack.c.l.b16 %v514
        %v1098 = vunpack.c.l.b16 %v515
        %v1099 = vunpack.c.l.b16 %v516
        %v1100 = vunpack.c.l.b16 %v517
        %v1101 = vunpack.c.l.b16 %v518
        %v1102 = vunpack.c.l.b16 %v519
        %v1103 = vunpack.c.l.b16 %v520
        %v1104 = vunpack.c.l.b16 %v521
        %v1105 = vunpack.c.l.b16 %v522
        %v1106 = vunpack.c.l.b16 %v523
        %v1107 = vunpack.c.l.b16 %v524
        %v1108 = vunpack.c.l.b16 %v525
        %v1109 = vunpack.c.l.b16 %v526
        %v1110 = vunpack.c.l.b16 %v527
        %v1111 = vunpack.c.l.b16 %v528
        %v1112 = vunpack.c.l.b16 %v529
        %v1113 = vunpack.c.l.b16 %v530
        %v1114 = vunpack.c.l.b16 %v531
        %v1115 = vunpack.c.l.b16 %v532
        %v1116 = vunpack.c.l.b16 %v533
        %v1117 = vunpack.c.l.b16 %v534
        %v1118 = vunpack.c.l.b16 %v535
        %v1119 = vunpack.c.l.b16 %v536
        %v1120 = vpack.c.b16 %v993, %v992
        %v1121 = vpack.c.b16 %v995, %v994
        %v1122 = vpack.c.b16 %v997, %v996
        %v1123 = vpack.c.b16 %v999, %v998
        %v1124 = vpack.c.b16 %v1001, %v1000
        %v1125 = vpack.c.b16 %v1003, %v1002
        %v1126 = vpack.c.b16 %v1005, %v1004
        %v1127 = vpack.c.b16 %v1007, %v1006
        %v1128 = vpack.c.b16 %v1009, %v1008
        %v1129 = vpack.c.b16 %v1011, %v1010
        %v1130 = vpack.c.b16 %v1013, %v1012
        %v1131 = vpack.c.b16 %v1015, %v1014
        %v1132 = vpack.c.b16 %v1017, %v1016
        %v1133 = vpack.c.b16 %v1019, %v1018
        %v1134 = vpack.c.b16 %v1021, %v1020
        %v1135 = vpack.c.b16 %v1023, %v1022
        %v1136 = vpack.c.b16 %v1025, %v1024
        %v1137 = vpack.c.b16 %v1027, %v1026
        %v1138 = vpack.c.b16 %v1029, %v1028
        %v1139 = vpack.c.b16 %v1031, %v1030
        %v1140 = vpack.c.b16 %v1033, %v1032
        %v1141 = vpack.c.b16 %v1035, %v1034
        %v1142 = vpack.c.b16 %v1037, %v1036
        %v1143 = vpack.c.b16 %v1039, %v1038
        %v1144 = vpack.c.b16 %v1041, %v1040
        %v1145 = vpack.c.b16 %v1043, %v1042
        %v1146 = vpack.c.b16 %v1045, %v1044
        %v1147 = vpack.c.b16 %v1047, %v1046
        %v1148 = vpack.c.b16 %v1049, %v1048
        %v1149 = vpack.c.b16 %v1051, %v1050
        %v1150 = vpack.c.b16 %v1053, %v1052
        %v1151 = vpack.c.b16 %v1055, %v1054
        %v1152 = vpack.c.b16 %v1057, %v1056
        %v1153 = vpack.c.b16 %v1059, %v1058
        %v1154 = vpack.c.b16 %v1061, %v1060
        %v1155 = vpack.c.b16 %v1063, %v1062
        %v1156 = vpack.c.b16 %v1065, %v1064
        %v1157 = vpack.c.b16 %v1067, %v1066
        %v1158 = vpack.c.b16 %v1069, %v1068
        %v1159 = vpack.c.b16 %v1071, %v1070
        %v1160 = vpack.c.b16 %v1073, %v1072
        %v1161 = vpack.c.b16 %v1075, %v1074
        %v1162 = vpack.c.b16 %v1077, %v1076
        %v1163 = vpack.c.b16 %v1079, %v1078
        %v1164 = vpack.c.b16 %v1081, %v1080
        %v1165 = vpack.c.b16 %v1083, %v1082
        %v1166 = vpack.c.b16 %v1085, %v1084
        %v1167 = vpack.c.b16 %v1087, %v1086
        %v1168 = vpack.c.b16 %v1089, %v1088
        %v1169 = vpack.c.b16 %v1091, %v1090
        %v1170 = vpack.c.b16 %v1093, %v1092
        %v1171 = vpack.c.b16 %v1095, %v1094
        %v1172 = vpack.c.b16 %v1097, %v1096
        %v1173 = vpack.c.b16 %v1099, %v1098
        %v1174 = vpack.c.b16 %v1101, %v1100
        %v1175 = vpack.c.b16 %v1103, %v1102
        %v1176 = vpack.c.b16 %v1105, %v1104
        %v1177 = vpack.c.b16 %v1107, %v1106
        %v1178 = vpack.c.b16 %v1109, %v1108
        %v1179 = vpack.c.b16 %v1111, %v1110
        %v1180 = vpack.c.b16 %v1113, %v1112
        %v1181 = vpack.c.b16 %v1115, %v1114
        %v1182 = vpack.c.b16 %v1117, %v1116
        %v1183 = vpack.c.b16 %v1119, %v1118
        %1248 = vmatprep.subr.bf16.mxu0 0
        %1249 = vmatpush1.bf16.msra.mxu0 %v1120
        %1250 = vmatprep.subr.bf16.mxu0 0
        %1251 = vmatpush1.bf16.msra.mxu0 %v1121
        %1252 = vmatprep.subr.bf16.mxu0 0
        %1253 = vmatpush1.bf16.msra.mxu0 %v1122
        %1254 = vmatprep.subr.bf16.mxu0 0
        %1255 = vmatpush1.bf16.msra.mxu0 %v1123
        %1256 = vmatprep.subr.bf16.mxu0 0
        %1257 = vmatpush1.bf16.msra.mxu0 %v1124
        %1258 = vmatprep.subr.bf16.mxu0 0
        %1259 = vmatpush1.bf16.msra.mxu0 %v1125
        %1260 = vmatprep.subr.bf16.mxu0 0
        %1261 = vmatpush1.bf16.msra.mxu0 %v1126
        %1262 = vmatprep.subr.bf16.mxu0 0
        %1263 = vmatpush1.bf16.msra.mxu0 %v1127
        %1264 = vmatprep.subr.bf16.mxu0 0
        %1265 = vmatpush1.bf16.msra.mxu0 %v1128
        %1266 = vmatprep.subr.bf16.mxu0 0
        %1267 = vmatpush1.bf16.msra.mxu0 %v1129
        %1268 = vmatprep.subr.bf16.mxu0 0
        %1269 = vmatpush1.bf16.msra.mxu0 %v1130
        %1270 = vmatprep.subr.bf16.mxu0 0
        %1271 = vmatpush1.bf16.msra.mxu0 %v1131
        %1272 = vmatprep.subr.bf16.mxu0 0
        %1273 = vmatpush1.bf16.msra.mxu0 %v1132
        %1274 = vmatprep.subr.bf16.mxu0 0
        %1275 = vmatpush1.bf16.msra.mxu0 %v1133
        %1276 = vmatprep.subr.bf16.mxu0 0
        %1277 = vmatpush1.bf16.msra.mxu0 %v1134
        %1278 = vmatprep.subr.bf16.mxu0 0
        %1279 = vmatpush1.bf16.msra.mxu0 %v1135
        %1280 = vmatprep.mubr.bf16.mxu0 %v737
        %1281 = vmatmul.mubr.bf16.gmra.mrb[0].mxu0 %v736
        %v1282 = vpop.f32.mrb[0].mxu0
        %v1283 = vadd.f32 %v542, %v1282
        %v1284 = vpop.f32.mrb[0].mxu0
        %v1285 = vpop.f32.mrb[0].mxu0
        %v1286 = vadd.f32 %v542, %v1285
        %v1287 = vpop.f32.mrb[0].mxu0
        %1288 = vmatprep.mubr.bf16.mxu0 %v745
        %1289 = vmatmul.mubr.bf16.gmra.mrb[0].mxu0 %v744
        %v1290 = vpop.f32.mrb[0].mxu0
        %v1291 = vadd.f32 %v542, %v1290
        %v1292 = vpop.f32.mrb[0].mxu0
        %v1293 = vpop.f32.mrb[0].mxu0
        %v1294 = vadd.f32 %v542, %v1293
        %v1295 = vpop.f32.mrb[0].mxu0
        %1296 = vmatprep.mubr.bf16.mxu0 %v753
        %1297 = vmatmul.mubr.bf16.gmra.mrb[0].mxu0 %v752
        %v1298 = vpop.f32.mrb[0].mxu0
        %v1299 = vadd.f32 %v542, %v1298
        %v1300 = vpop.f32.mrb[0].mxu0
        %v1301 = vpop.f32.mrb[0].mxu0
        %v1302 = vadd.f32 %v542, %v1301
        %v1303 = vpop.f32.mrb[0].mxu0
        %1304 = vmatprep.mubr.bf16.mxu0 %v761
        %1305 = vmatmul.mubr.bf16.gmra.mrb[0].mxu0 %v760
        %v1306 = vpop.f32.mrb[0].mxu0
        %v1307 = vadd.f32 %v542, %v1306
        %v1308 = vpop.f32.mrb[0].mxu0
        %v1309 = vpop.f32.mrb[0].mxu0
        %v1310 = vadd.f32 %v542, %v1309
        %v1311 = vpop.f32.mrb[0].mxu0
        %1312 = vmatprep.mubr.bf16.mxu0 %v769
        %1313 = vmatmul.mubr.bf16.gmra.mrb[0].mxu0 %v768
        %v1314 = vpop.f32.mrb[0].mxu0
        %v1315 = vadd.f32 %v542, %v1314
        %v1316 = vpop.f32.mrb[0].mxu0
        %v1317 = vpop.f32.mrb[0].mxu0
        %v1318 = vadd.f32 %v542, %v1317
        %v1319 = vpop.f32.mrb[0].mxu0
        %1320 = vmatprep.mubr.bf16.mxu0 %v777
        %1321 = vmatmul.mubr.bf16.gmra.mrb[0].mxu0 %v776
        %v1322 = vpop.f32.mrb[0].mxu0
        %v1323 = vadd.f32 %v542, %v1322
        %v1324 = vpop.f32.mrb[0].mxu0
        %v1325 = vpop.f32.mrb[0].mxu0
        %v1326 = vadd.f32 %v542, %v1325
        %v1327 = vpop.f32.mrb[0].mxu0
        %1328 = vmatprep.mubr.bf16.mxu0 %v785
        %1329 = vmatmul.mubr.bf16.gmra.mrb[0].mxu0 %v784
        %v1330 = vpop.f32.mrb[0].mxu0
        %v1331 = vadd.f32 %v542, %v1330
        %v1332 = vpop.f32.mrb[0].mxu0
        %v1333 = vpop.f32.mrb[0].mxu0
        %v1334 = vadd.f32 %v542, %v1333
        %v1335 = vpop.f32.mrb[0].mxu0
        %1336 = vmatprep.mubr.bf16.mxu0 %v793
        %1337 = vmatmul.mubr.bf16.gmra.mrb[0].mxu0 %v792
        %v1338 = vpop.f32.mrb[0].mxu0
        %v1339 = vadd.f32 %v542, %v1338
        %v1340 = vpop.f32.mrb[0].mxu0
        %v1341 = vpop.f32.mrb[0].mxu0
        %v1342 = vadd.f32 %v542, %v1341
        %v1343 = vpop.f32.mrb[0].mxu0
        %1344 = vdwg.mxu0
        %1345 = vmatprep.subr.bf16.mxu0 0
        %1346 = vmatpush1.bf16.msra.mxu0 %v1136
        %1347 = vmatprep.subr.bf16.mxu0 0
        %1348 = vmatpush1.bf16.msra.mxu0 %v1137
        %1349 = vmatprep.subr.bf16.mxu0 0
        %1350 = vmatpush1.bf16.msra.mxu0 %v1138
        %1351 = vmatprep.subr.bf16.mxu0 0
        %1352 = vmatpush1.bf16.msra.mxu0 %v1139
        %1353 = vmatprep.subr.bf16.mxu0 0
        %1354 = vmatpush1.bf16.msra.mxu0 %v1140
        %1355 = vmatprep.subr.bf16.mxu0 0
        %1356 = vmatpush1.bf16.msra.mxu0 %v1141
        %1357 = vmatprep.subr.bf16.mxu0 0
        %1358 = vmatpush1.bf16.msra.mxu0 %v1142
        %1359 = vmatprep.subr.bf16.mxu0 0
        %1360 = vmatpush1.bf16.msra.mxu0 %v1143
        %1361 = vmatprep.subr.bf16.mxu0 0
        %1362 = vmatpush1.bf16.msra.mxu0 %v1144
        %1363 = vmatprep.subr.bf16.mxu0 0
        %1364 = vmatpush1.bf16.msra.mxu0 %v1145
        %1365 = vmatprep.subr.bf16.mxu0 0
        %1366 = vmatpush1.bf16.msra.mxu0 %v1146
        %1367 = vmatprep.subr.bf16.mxu0 0
        %1368 = vmatpush1.bf16.msra.mxu0 %v1147
        %1369 = vmatprep.subr.bf16.mxu0 0
        %1370 = vmatpush1.bf16.msra.mxu0 %v1148
        %1371 = vmatprep.subr.bf16.mxu0 0
        %1372 = vmatpush1.bf16.msra.mxu0 %v1149
        %1373 = vmatprep.subr.bf16.mxu0 0
        %1374 = vmatpush1.bf16.msra.mxu0 %v1150
        %1375 = vmatprep.subr.bf16.mxu0 0
        %1376 = vmatpush1.bf16.msra.mxu0 %v1151
        %1377 = vmatprep.mubr.bf16.mxu0 %v739
        %1378 = vmatmul.mubr.bf16.gmra.mrb[0].mxu0 %v738
        %v1379 = vpop.f32.mrb[0].mxu0
        %v1380 = vadd.f32 %v1283, %v1379
        %v1381 = vpop.f32.mrb[0].mxu0
        %v1382 = vpop.f32.mrb[0].mxu0
        %v1383 = vadd.f32 %v1286, %v1382
        %v1384 = vpop.f32.mrb[0].mxu0
        %1385 = vmatprep.mubr.bf16.mxu0 %v747
        %1386 = vmatmul.mubr.bf16.gmra.mrb[0].mxu0 %v746
        %v1387 = vpop.f32.mrb[0].mxu0
        %v1388 = vadd.f32 %v1291, %v1387
        %v1389 = vpop.f32.mrb[0].mxu0
        %v1390 = vpop.f32.mrb[0].mxu0
        %v1391 = vadd.f32 %v1294, %v1390
        %v1392 = vpop.f32.mrb[0].mxu0
        %1393 = vmatprep.mubr.bf16.mxu0 %v755
        %1394 = vmatmul.mubr.bf16.gmra.mrb[0].mxu0 %v754
        %v1395 = vpop.f32.mrb[0].mxu0
        %v1396 = vadd.f32 %v1299, %v1395
        %v1397 = vpop.f32.mrb[0].mxu0
        %v1398 = vpop.f32.mrb[0].mxu0
        %v1399 = vadd.f32 %v1302, %v1398
        %v1400 = vpop.f32.mrb[0].mxu0
        %1401 = vmatprep.mubr.bf16.mxu0 %v763
        %1402 = vmatmul.mubr.bf16.gmra.mrb[0].mxu0 %v762
        %v1403 = vpop.f32.mrb[0].mxu0
        %v1404 = vadd.f32 %v1307, %v1403
        %v1405 = vpop.f32.mrb[0].mxu0
        %v1406 = vpop.f32.mrb[0].mxu0
        %v1407 = vadd.f32 %v1310, %v1406
        %v1408 = vpop.f32.mrb[0].mxu0
        %1409 = vmatprep.mubr.bf16.mxu0 %v771
        %1410 = vmatmul.mubr.bf16.gmra.mrb[0].mxu0 %v770
        %v1411 = vpop.f32.mrb[0].mxu0
        %v1412 = vadd.f32 %v1315, %v1411
        %v1413 = vpop.f32.mrb[0].mxu0
        %v1414 = vpop.f32.mrb[0].mxu0
        %v1415 = vadd.f32 %v1318, %v1414
        %v1416 = vpop.f32.mrb[0].mxu0
        %1417 = vmatprep.mubr.bf16.mxu0 %v779
        %1418 = vmatmul.mubr.bf16.gmra.mrb[0].mxu0 %v778
        %v1419 = vpop.f32.mrb[0].mxu0
        %v1420 = vadd.f32 %v1323, %v1419
        %v1421 = vpop.f32.mrb[0].mxu0
        %v1422 = vpop.f32.mrb[0].mxu0
        %v1423 = vadd.f32 %v1326, %v1422
        %v1424 = vpop.f32.mrb[0].mxu0
        %1425 = vmatprep.mubr.bf16.mxu0 %v787
        %1426 = vmatmul.mubr.bf16.gmra.mrb[0].mxu0 %v786
        %v1427 = vpop.f32.mrb[0].mxu0
        %v1428 = vadd.f32 %v1331, %v1427
        %v1429 = vpop.f32.mrb[0].mxu0
        %v1430 = vpop.f32.mrb[0].mxu0
        %v1431 = vadd.f32 %v1334, %v1430
        %v1432 = vpop.f32.mrb[0].mxu0
        %1433 = vmatprep.mubr.bf16.mxu0 %v795
        %1434 = vmatmul.mubr.bf16.gmra.mrb[0].mxu0 %v794
        %v1435 = vpop.f32.mrb[0].mxu0
        %v1436 = vadd.f32 %v1339, %v1435
        %v1437 = vpop.f32.mrb[0].mxu0
        %v1438 = vpop.f32.mrb[0].mxu0
        %v1439 = vadd.f32 %v1342, %v1438
        %v1440 = vpop.f32.mrb[0].mxu0
        %1441 = vdwg.mxu0
        %1442 = vmatprep.subr.bf16.mxu0 0
        %1443 = vmatpush1.bf16.msra.mxu0 %v1152
        %1444 = vmatprep.subr.bf16.mxu0 0
        %1445 = vmatpush1.bf16.msra.mxu0 %v1153
        %1446 = vmatprep.subr.bf16.mxu0 0
        %1447 = vmatpush1.bf16.msra.mxu0 %v1154
        %1448 = vmatprep.subr.bf16.mxu0 0
        %1449 = vmatpush1.bf16.msra.mxu0 %v1155
        %1450 = vmatprep.subr.bf16.mxu0 0
        %1451 = vmatpush1.bf16.msra.mxu0 %v1156
        %1452 = vmatprep.subr.bf16.mxu0 0
        %1453 = vmatpush1.bf16.msra.mxu0 %v1157
        %1454 = vmatprep.subr.bf16.mxu0 0
        %1455 = vmatpush1.bf16.msra.mxu0 %v1158
        %1456 = vmatprep.subr.bf16.mxu0 0
        %1457 = vmatpush1.bf16.msra.mxu0 %v1159
        %1458 = vmatprep.subr.bf16.mxu0 0
        %1459 = vmatpush1.bf16.msra.mxu0 %v1160
        %1460 = vmatprep.subr.bf16.mxu0 0
        %1461 = vmatpush1.bf16.msra.mxu0 %v1161
        %1462 = vmatprep.subr.bf16.mxu0 0
        %1463 = vmatpush1.bf16.msra.mxu0 %v1162
        %1464 = vmatprep.subr.bf16.mxu0 0
        %1465 = vmatpush1.bf16.msra.mxu0 %v1163
        %1466 = vmatprep.subr.bf16.mxu0 0
        %1467 = vmatpush1.bf16.msra.mxu0 %v1164
        %1468 = vmatprep.subr.bf16.mxu0 0
        %1469 = vmatpush1.bf16.msra.mxu0 %v1165
        %1470 = vmatprep.subr.bf16.mxu0 0
        %1471 = vmatpush1.bf16.msra.mxu0 %v1166
        %1472 = vmatprep.subr.bf16.mxu0 0
        %1473 = vmatpush1.bf16.msra.mxu0 %v1167
        %1474 = vmatprep.mubr.bf16.mxu0 %v741
        %1475 = vmatmul.mubr.bf16.gmra.mrb[0].mxu0 %v740
        %v1476 = vpop.f32.mrb[0].mxu0
        %v1477 = vadd.f32 %v1380, %v1476
        %v1478 = vpop.f32.mrb[0].mxu0
        %v1479 = vpop.f32.mrb[0].mxu0
        %v1480 = vadd.f32 %v1383, %v1479
        %v1481 = vpop.f32.mrb[0].mxu0
        %1482 = vmatprep.mubr.bf16.mxu0 %v749
        %1483 = vmatmul.mubr.bf16.gmra.mrb[0].mxu0 %v748
        %v1484 = vpop.f32.mrb[0].mxu0
        %v1485 = vadd.f32 %v1388, %v1484
        %v1486 = vpop.f32.mrb[0].mxu0
        %v1487 = vpop.f32.mrb[0].mxu0
        %v1488 = vadd.f32 %v1391, %v1487
        %v1489 = vpop.f32.mrb[0].mxu0
        %1490 = vmatprep.mubr.bf16.mxu0 %v757
        %1491 = vmatmul.mubr.bf16.gmra.mrb[0].mxu0 %v756
        %v1492 = vpop.f32.mrb[0].mxu0
        %v1493 = vadd.f32 %v1396, %v1492
        %v1494 = vpop.f32.mrb[0].mxu0
        %v1495 = vpop.f32.mrb[0].mxu0
        %v1496 = vadd.f32 %v1399, %v1495
        %v1497 = vpop.f32.mrb[0].mxu0
        %1498 = vmatprep.mubr.bf16.mxu0 %v765
        %1499 = vmatmul.mubr.bf16.gmra.mrb[0].mxu0 %v764
        %v1500 = vpop.f32.mrb[0].mxu0
        %v1501 = vadd.f32 %v1404, %v1500
        %v1502 = vpop.f32.mrb[0].mxu0
        %v1503 = vpop.f32.mrb[0].mxu0
        %v1504 = vadd.f32 %v1407, %v1503
        %v1505 = vpop.f32.mrb[0].mxu0
        %1506 = vmatprep.mubr.bf16.mxu0 %v773
        %1507 = vmatmul.mubr.bf16.gmra.mrb[0].mxu0 %v772
        %v1508 = vpop.f32.mrb[0].mxu0
        %v1509 = vadd.f32 %v1412, %v1508
        %v1510 = vpop.f32.mrb[0].mxu0
        %v1511 = vpop.f32.mrb[0].mxu0
        %v1512 = vadd.f32 %v1415, %v1511
        %v1513 = vpop.f32.mrb[0].mxu0
        %1514 = vmatprep.mubr.bf16.mxu0 %v781
        %1515 = vmatmul.mubr.bf16.gmra.mrb[0].mxu0 %v780
        %v1516 = vpop.f32.mrb[0].mxu0
        %v1517 = vadd.f32 %v1420, %v1516
        %v1518 = vpop.f32.mrb[0].mxu0
        %v1519 = vpop.f32.mrb[0].mxu0
        %v1520 = vadd.f32 %v1423, %v1519
        %v1521 = vpop.f32.mrb[0].mxu0
        %1522 = vmatprep.mubr.bf16.mxu0 %v789
        %1523 = vmatmul.mubr.bf16.gmra.mrb[0].mxu0 %v788
        %v1524 = vpop.f32.mrb[0].mxu0
        %v1525 = vadd.f32 %v1428, %v1524
        %v1526 = vpop.f32.mrb[0].mxu0
        %v1527 = vpop.f32.mrb[0].mxu0
        %v1528 = vadd.f32 %v1431, %v1527
        %v1529 = vpop.f32.mrb[0].mxu0
        %1530 = vmatprep.mubr.bf16.mxu0 %v797
        %1531 = vmatmul.mubr.bf16.gmra.mrb[0].mxu0 %v796
        %v1532 = vpop.f32.mrb[0].mxu0
        %v1533 = vadd.f32 %v1436, %v1532
        %v1534 = vpop.f32.mrb[0].mxu0
        %v1535 = vpop.f32.mrb[0].mxu0
        %v1536 = vadd.f32 %v1439, %v1535
        %v1537 = vpop.f32.mrb[0].mxu0
        %1538 = vdwg.mxu0
        %1539 = vmatprep.subr.bf16.mxu0 0
        %1540 = vmatpush1.bf16.msra.mxu0 %v1168
        %1541 = vmatprep.subr.bf16.mxu0 0
        %1542 = vmatpush1.bf16.msra.mxu0 %v1169
        %1543 = vmatprep.subr.bf16.mxu0 0
        %1544 = vmatpush1.bf16.msra.mxu0 %v1170
        %1545 = vmatprep.subr.bf16.mxu0 0
        %1546 = vmatpush1.bf16.msra.mxu0 %v1171
        %1547 = vmatprep.subr.bf16.mxu0 0
        %1548 = vmatpush1.bf16.msra.mxu0 %v1172
        %1549 = vmatprep.subr.bf16.mxu0 0
        %1550 = vmatpush1.bf16.msra.mxu0 %v1173
        %1551 = vmatprep.subr.bf16.mxu0 0
        %1552 = vmatpush1.bf16.msra.mxu0 %v1174
        %1553 = vmatprep.subr.bf16.mxu0 0
        %1554 = vmatpush1.bf16.msra.mxu0 %v1175
        %1555 = vmatprep.subr.bf16.mxu0 0
        %1556 = vmatpush1.bf16.msra.mxu0 %v1176
        %1557 = vmatprep.subr.bf16.mxu0 0
        %1558 = vmatpush1.bf16.msra.mxu0 %v1177
        %1559 = vmatprep.subr.bf16.mxu0 0
        %1560 = vmatpush1.bf16.msra.mxu0 %v1178
        %1561 = vmatprep.subr.bf16.mxu0 0
        %1562 = vmatpush1.bf16.msra.mxu0 %v1179
        %1563 = vmatprep.subr.bf16.mxu0 0
        %1564 = vmatpush1.bf16.msra.mxu0 %v1180
        %1565 = vmatprep.subr.bf16.mxu0 0
        %1566 = vmatpush1.bf16.msra.mxu0 %v1181
        %1567 = vmatprep.subr.bf16.mxu0 0
        %1568 = vmatpush1.bf16.msra.mxu0 %v1182
        %1569 = vmatprep.subr.bf16.mxu0 0
        %1570 = vmatpush1.bf16.msra.mxu0 %v1183
        %1571 = vmatprep.mubr.bf16.mxu0 %v743
        %1572 = vmatmul.mubr.bf16.gmra.mrb[0].mxu0 %v742
        %v1573 = vpop.f32.mrb[0].mxu0
        %v1574 = vadd.f32 %v1477, %v1573
        %v1575 = vpop.f32.mrb[0].mxu0
        %v1576 = vpop.f32.mrb[0].mxu0
        %v1577 = vadd.f32 %v1480, %v1576
        %v1578 = vpop.f32.mrb[0].mxu0
        %1579 = vmatprep.mubr.bf16.mxu0 %v751
        %1580 = vmatmul.mubr.bf16.gmra.mrb[0].mxu0 %v750
        %v1581 = vpop.f32.mrb[0].mxu0
        %v1582 = vadd.f32 %v1485, %v1581
        %v1583 = vpop.f32.mrb[0].mxu0
        %v1584 = vpop.f32.mrb[0].mxu0
        %v1585 = vadd.f32 %v1488, %v1584
        %v1586 = vpop.f32.mrb[0].mxu0
        %1587 = vmatprep.mubr.bf16.mxu0 %v759
        %1588 = vmatmul.mubr.bf16.gmra.mrb[0].mxu0 %v758
        %v1589 = vpop.f32.mrb[0].mxu0
        %v1590 = vadd.f32 %v1493, %v1589
        %v1591 = vpop.f32.mrb[0].mxu0
        %v1592 = vpop.f32.mrb[0].mxu0
        %v1593 = vadd.f32 %v1496, %v1592
        %v1594 = vpop.f32.mrb[0].mxu0
        %1595 = vmatprep.mubr.bf16.mxu0 %v767
        %1596 = vmatmul.mubr.bf16.gmra.mrb[0].mxu0 %v766
        %v1597 = vpop.f32.mrb[0].mxu0
        %v1598 = vadd.f32 %v1501, %v1597
        %v1599 = vpop.f32.mrb[0].mxu0
        %v1600 = vpop.f32.mrb[0].mxu0
        %v1601 = vadd.f32 %v1504, %v1600
        %v1602 = vpop.f32.mrb[0].mxu0
        %1603 = vmatprep.mubr.bf16.mxu0 %v775
        %1604 = vmatmul.mubr.bf16.gmra.mrb[0].mxu0 %v774
        %v1605 = vpop.f32.mrb[0].mxu0
        %v1606 = vadd.f32 %v1509, %v1605
        %v1607 = vpop.f32.mrb[0].mxu0
        %v1608 = vpop.f32.mrb[0].mxu0
        %v1609 = vadd.f32 %v1512, %v1608
        %v1610 = vpop.f32.mrb[0].mxu0
        %1611 = vmatprep.mubr.bf16.mxu0 %v783
        %1612 = vmatmul.mubr.bf16.gmra.mrb[0].mxu0 %v782
        %v1613 = vpop.f32.mrb[0].mxu0
        %v1614 = vadd.f32 %v1517, %v1613
        %v1615 = vpop.f32.mrb[0].mxu0
        %v1616 = vpop.f32.mrb[0].mxu0
        %v1617 = vadd.f32 %v1520, %v1616
        %v1618 = vpop.f32.mrb[0].mxu0
        %1619 = vmatprep.mubr.bf16.mxu0 %v791
        %1620 = vmatmul.mubr.bf16.gmra.mrb[0].mxu0 %v790
        %v1621 = vpop.f32.mrb[0].mxu0
        %v1622 = vadd.f32 %v1525, %v1621
        %v1623 = vpop.f32.mrb[0].mxu0
        %v1624 = vpop.f32.mrb[0].mxu0
        %v1625 = vadd.f32 %v1528, %v1624
        %v1626 = vpop.f32.mrb[0].mxu0
        %1627 = vmatprep.mubr.bf16.mxu0 %v799
        %1628 = vmatmul.mubr.bf16.gmra.mrb[0].mxu0 %v798
        %v1629 = vpop.f32.mrb[0].mxu0
        %v1630 = vadd.f32 %v1533, %v1629
        %v1631 = vpop.f32.mrb[0].mxu0
        %v1632 = vpop.f32.mrb[0].mxu0
        %v1633 = vadd.f32 %v1536, %v1632
        %v1634 = vpop.f32.mrb[0].mxu0
        %1635 = vdwg.mxu0
        %v1636 = vmax.f32 %v1574, 0.0
        %v1637 = vmax.f32 %v1577, 0.0
        %v1638 = vmax.f32 %v1582, 0.0
        %v1639 = vmax.f32 %v1585, 0.0
        %v1640 = vmax.f32 %v1590, 0.0
        %v1641 = vmax.f32 %v1593, 0.0
        %v1642 = vmax.f32 %v1598, 0.0
        %v1643 = vmax.f32 %v1601, 0.0
        %v1644 = vmax.f32 %v1606, 0.0
        %v1645 = vmax.f32 %v1609, 0.0
        %v1646 = vmax.f32 %v1614, 0.0
        %v1647 = vmax.f32 %v1617, 0.0
        %v1648 = vmax.f32 %v1622, 0.0
        %v1649 = vmax.f32 %v1625, 0.0
        %v1650 = vmax.f32 %v1630, 0.0
        %v1651 = vmax.f32 %v1633, 0.0
        %1652 = vst [vmem:[#allocation2] sm:$0xff] %v1636
        %1653 = vst [vmem:[#allocation2 + $0x8] sm:$0xff] %v1637
        %1654 = vst [vmem:[#allocation2 + $0x10] sm:$0xff] %v1638
        %1655 = vst [vmem:[#allocation2 + $0x18] sm:$0xff] %v1639
        %1656 = vst [vmem:[#allocation2 + $0x20] sm:$0xff] %v1640
        %1657 = vst [vmem:[#allocation2 + $0x28] sm:$0xff] %v1641
        %1658 = vst [vmem:[#allocation2 + $0x30] sm:$0xff] %v1642
        %1659 = vst [vmem:[#allocation2 + $0x38] sm:$0xff] %v1643
        %1660 = vst [vmem:[#allocation2 + $0x40] sm:$0xff] %v1644
        %1661 = vst [vmem:[#allocation2 + $0x48] sm:$0xff] %v1645
        %1662 = vst [vmem:[#allocation2 + $0x50] sm:$0xff] %v1646
        %1663 = vst [vmem:[#allocation2 + $0x58] sm:$0xff] %v1647
        %1664 = vst [vmem:[#allocation2 + $0x60] sm:$0xff] %v1648
        %1665 = vst [vmem:[#allocation2 + $0x68] sm:$0xff] %v1649
        %1666 = vst [vmem:[#allocation2 + $0x70] sm:$0xff] %v1650
        %1667 = vst [vmem:[#allocation2 + $0x78] sm:$0xff] %v1651
        %v1668 = vld [vmem:[#allocation2] sm:$0xff]
        %v1669 = vld [vmem:[#allocation2 + $0x8] sm:$0xff]
        %v1670 = vld [vmem:[#allocation2 + $0x10] sm:$0xff]
        %v1671 = vld [vmem:[#allocation2 + $0x18] sm:$0xff]
        %v1672 = vld [vmem:[#allocation2 + $0x20] sm:$0xff]
        %v1673 = vld [vmem:[#allocation2 + $0x28] sm:$0xff]
        %v1674 = vld [vmem:[#allocation2 + $0x30] sm:$0xff]
        %v1675 = vld [vmem:[#allocation2 + $0x38] sm:$0xff]
        %v1676 = vld [vmem:[#allocation2 + $0x40] sm:$0xff]
        %v1677 = vld [vmem:[#allocation2 + $0x48] sm:$0xff]
        %v1678 = vld [vmem:[#allocation2 + $0x50] sm:$0xff]
        %v1679 = vld [vmem:[#allocation2 + $0x58] sm:$0xff]
        %v1680 = vld [vmem:[#allocation2 + $0x60] sm:$0xff]
        %v1681 = vld [vmem:[#allocation2 + $0x68] sm:$0xff]
        %v1682 = vld [vmem:[#allocation2 + $0x70] sm:$0xff]
        %v1683 = vld [vmem:[#allocation2 + $0x78] sm:$0xff]
        %v1684 = vpack.c.bf16 %v1669, %v1668
        %v1685 = vpack.c.bf16 %v1671, %v1670
        %v1686 = vpack.c.bf16 %v1673, %v1672
        %v1687 = vpack.c.bf16 %v1675, %v1674
        %v1688 = vpack.c.bf16 %v1677, %v1676
        %v1689 = vpack.c.bf16 %v1679, %v1678
        %v1690 = vpack.c.bf16 %v1681, %v1680
        %v1691 = vpack.c.bf16 %v1683, %v1682
        %v1692 = vld [vmem:[#allocation8] sm:$0xf]
        %v1693 = vld [vmem:[#allocation8 + $0x4] sm:$0xf]
        %v1694 = vld [vmem:[#allocation8 + $0x8] sm:$0xf]
        %v1695 = vld [vmem:[#allocation8 + $0xc] sm:$0xf]
        %v1696 = vld [vmem:[#allocation8 + $0x10] sm:$0xf]
        %v1697 = vld [vmem:[#allocation8 + $0x14] sm:$0xf]
        %v1698 = vld [vmem:[#allocation8 + $0x18] sm:$0xf]
        %v1699 = vld [vmem:[#allocation8 + $0x1c] sm:$0xf]
        %v1700 = vld [vmem:[#allocation8 + $0x20] sm:$0xf]
        %v1701 = vld [vmem:[#allocation8 + $0x24] sm:$0xf]
        %v1702 = vld [vmem:[#allocation8 + $0x28] sm:$0xf]
        %v1703 = vld [vmem:[#allocation8 + $0x2c] sm:$0xf]
        %v1704 = vld [vmem:[#allocation8 + $0x30] sm:$0xf]
        %v1705 = vld [vmem:[#allocation8 + $0x34] sm:$0xf]
        %v1706 = vld [vmem:[#allocation8 + $0x38] sm:$0xf]
        %v1707 = vld [vmem:[#allocation8 + $0x3c] sm:$0xf]
        %v1708 = vld [vmem:[%s4] sm:$0x1]
        %v1710 = vlaneseq
        %v1711 = vshrl.u32 %v1710, 7
        %v1712 = vsub.s32 0, %v1711
        %v1713 = vrot.slane %v1708, %v1712
        %v1731 = vunpack.c.l.b16 %v1692
        %v1732 = vunpack.c.l.b16 %v1693
        %v1733 = vunpack.c.l.b16 %v1694
        %v1734 = vunpack.c.l.b16 %v1695
        %v1735 = vunpack.c.l.b16 %v1696
        %v1736 = vunpack.c.l.b16 %v1697
        %v1737 = vunpack.c.l.b16 %v1698
        %v1738 = vunpack.c.l.b16 %v1699
        %v1739 = vunpack.c.l.b16 %v1700
        %v1740 = vunpack.c.l.b16 %v1701
        %v1741 = vunpack.c.l.b16 %v1702
        %v1742 = vunpack.c.l.b16 %v1703
        %v1743 = vunpack.c.l.b16 %v1704
        %v1744 = vunpack.c.l.b16 %v1705
        %v1745 = vunpack.c.l.b16 %v1706
        %v1746 = vunpack.c.l.b16 %v1707
        %v1747 = vpack.c.b16 %v1732, %v1731
        %v1748 = vpack.c.b16 %v1734, %v1733
        %v1749 = vpack.c.b16 %v1736, %v1735
        %v1750 = vpack.c.b16 %v1738, %v1737
        %v1751 = vpack.c.b16 %v1740, %v1739
        %v1752 = vpack.c.b16 %v1742, %v1741
        %v1753 = vpack.c.b16 %v1744, %v1743
        %v1754 = vpack.c.b16 %v1746, %v1745
        %1763 = vmatprep.subr.bf16.mxu0 0
        %1764 = vmatpush1.bf16.msra.mxu0 %v1747
        %1765 = vmatprep.subr.bf16.mxu0 0
        %1766 = vmatpush1.bf16.msra.mxu0 %v1748
        %1767 = vmatprep.subr.bf16.mxu0 0
        %1768 = vmatpush1.bf16.msra.mxu0 %v1749
        %1769 = vmatprep.subr.bf16.mxu0 0
        %1770 = vmatpush1.bf16.msra.mxu0 %v1750
        %1771 = vmatprep.subr.bf16.mxu0 0
        %1772 = vmatpush1.bf16.msra.mxu0 %v1751
        %1773 = vmatprep.subr.bf16.mxu0 0
        %1774 = vmatpush1.bf16.msra.mxu0 %v1752
        %1775 = vmatprep.subr.bf16.mxu0 0
        %1776 = vmatpush1.bf16.msra.mxu0 %v1753
        %1777 = vmatprep.subr.bf16.mxu0 0
        %1778 = vmatpush1.bf16.msra.mxu0 %v1754
        %1779 = vmatprep.subr.bf16.mxu0 0
        %1780 = vmatpush1.bf16.msra.mxu0 0
        %1781 = vmatprep.subr.bf16.mxu0 0
        %1782 = vmatpush1.bf16.msra.mxu0 0
        %1783 = vmatprep.subr.bf16.mxu0 0
        %1784 = vmatpush1.bf16.msra.mxu0 0
        %1785 = vmatprep.subr.bf16.mxu0 0
        %1786 = vmatpush1.bf16.msra.mxu0 0
        %1787 = vmatprep.subr.bf16.mxu0 0
        %1788 = vmatpush1.bf16.msra.mxu0 0
        %1789 = vmatprep.subr.bf16.mxu0 0
        %1790 = vmatpush1.bf16.msra.mxu0 0
        %1791 = vmatprep.subr.bf16.mxu0 0
        %1792 = vmatpush1.bf16.msra.mxu0 0
        %1793 = vmatprep.subr.bf16.mxu0 0
        %1794 = vmatpush1.bf16.msra.mxu0 0
        %1795 = vmatprep.mubr.bf16.mxu0 0
        %1796 = vmatmul.mubr.bf16.gmra.mrb[0].mxu0 %v1684
        %v1797 = vpop.f32.mrb[0].mxu0
        %v1798 = vadd.f32 %v1713, %v1797
        %v1799 = vpop.f32.mrb[0].mxu0
        %v1800 = vpop.f32.mrb[0].mxu0
        %v1801 = vadd.f32 %v1713, %v1800
        %v1802 = vpop.f32.mrb[0].mxu0
        %1803 = vmatprep.mubr.bf16.mxu0 0
        %1804 = vmatmul.mubr.bf16.gmra.mrb[0].mxu0 %v1685
        %v1805 = vpop.f32.mrb[0].mxu0
        %v1806 = vadd.f32 %v1713, %v1805
        %v1807 = vpop.f32.mrb[0].mxu0
        %v1808 = vpop.f32.mrb[0].mxu0
        %v1809 = vadd.f32 %v1713, %v1808
        %v1810 = vpop.f32.mrb[0].mxu0
        %1811 = vmatprep.mubr.bf16.mxu0 0
        %1812 = vmatmul.mubr.bf16.gmra.mrb[0].mxu0 %v1686
        %v1813 = vpop.f32.mrb[0].mxu0
        %v1814 = vadd.f32 %v1713, %v1813
        %v1815 = vpop.f32.mrb[0].mxu0
        %v1816 = vpop.f32.mrb[0].mxu0
        %v1817 = vadd.f32 %v1713, %v1816
        %v1818 = vpop.f32.mrb[0].mxu0
        %1819 = vmatprep.mubr.bf16.mxu0 0
        %1820 = vmatmul.mubr.bf16.gmra.mrb[0].mxu0 %v1687
        %v1821 = vpop.f32.mrb[0].mxu0
        %v1822 = vadd.f32 %v1713, %v1821
        %v1823 = vpop.f32.mrb[0].mxu0
        %v1824 = vpop.f32.mrb[0].mxu0
        %v1825 = vadd.f32 %v1713, %v1824
        %v1826 = vpop.f32.mrb[0].mxu0
        %1827 = vmatprep.mubr.bf16.mxu0 0
        %1828 = vmatmul.mubr.bf16.gmra.mrb[0].mxu0 %v1688
        %v1829 = vpop.f32.mrb[0].mxu0
        %v1830 = vadd.f32 %v1713, %v1829
        %v1831 = vpop.f32.mrb[0].mxu0
        %v1832 = vpop.f32.mrb[0].mxu0
        %v1833 = vadd.f32 %v1713, %v1832
        %v1834 = vpop.f32.mrb[0].mxu0
        %1835 = vmatprep.mubr.bf16.mxu0 0
        %1836 = vmatmul.mubr.bf16.gmra.mrb[0].mxu0 %v1689
        %v1837 = vpop.f32.mrb[0].mxu0
        %v1838 = vadd.f32 %v1713, %v1837
        %v1839 = vpop.f32.mrb[0].mxu0
        %v1840 = vpop.f32.mrb[0].mxu0
        %v1841 = vadd.f32 %v1713, %v1840
        %v1842 = vpop.f32.mrb[0].mxu0
        %1843 = vmatprep.mubr.bf16.mxu0 0
        %1844 = vmatmul.mubr.bf16.gmra.mrb[0].mxu0 %v1690
        %v1845 = vpop.f32.mrb[0].mxu0
        %v1846 = vadd.f32 %v1713, %v1845
        %v1847 = vpop.f32.mrb[0].mxu0
        %v1848 = vpop.f32.mrb[0].mxu0
        %v1849 = vadd.f32 %v1713, %v1848
        %v1850 = vpop.f32.mrb[0].mxu0
        %1851 = vmatprep.mubr.bf16.mxu0 0
        %1852 = vmatmul.mubr.bf16.gmra.mrb[0].mxu0 %v1691
        %v1853 = vpop.f32.mrb[0].mxu0
        %v1854 = vadd.f32 %v1713, %v1853
        %v1855 = vpop.f32.mrb[0].mxu0
        %v1856 = vpop.f32.mrb[0].mxu0
        %v1857 = vadd.f32 %v1713, %v1856
        %v1858 = vpop.f32.mrb[0].mxu0
        %1859 = vdwg.mxu0
        %v1860 = vmax.f32 %v1798, 0.0
        %v1861 = vmax.f32 %v1801, 0.0
        %v1862 = vmax.f32 %v1806, 0.0
        %v1863 = vmax.f32 %v1809, 0.0
        %v1864 = vmax.f32 %v1814, 0.0
        %v1865 = vmax.f32 %v1817, 0.0
        %v1866 = vmax.f32 %v1822, 0.0
        %v1867 = vmax.f32 %v1825, 0.0
        %v1868 = vmax.f32 %v1830, 0.0
        %v1869 = vmax.f32 %v1833, 0.0
        %v1870 = vmax.f32 %v1838, 0.0
        %v1871 = vmax.f32 %v1841, 0.0
        %v1872 = vmax.f32 %v1846, 0.0
        %v1873 = vmax.f32 %v1849, 0.0
        %v1874 = vmax.f32 %v1854, 0.0
        %v1875 = vmax.f32 %v1857, 0.0
        %1876 = vst [vmem:[#allocation2] sm:$0xff] %v1860
        %1877 = vst [vmem:[#allocation2 + $0x8] sm:$0xff] %v1861
        %1878 = vst [vmem:[#allocation2 + $0x10] sm:$0xff] %v1862
        %1879 = vst [vmem:[#allocation2 + $0x18] sm:$0xff] %v1863
        %1880 = vst [vmem:[#allocation2 + $0x20] sm:$0xff] %v1864
        %1881 = vst [vmem:[#allocation2 + $0x28] sm:$0xff] %v1865
        %1882 = vst [vmem:[#allocation2 + $0x30] sm:$0xff] %v1866
        %1883 = vst [vmem:[#allocation2 + $0x38] sm:$0xff] %v1867
        %1884 = vst [vmem:[#allocation2 + $0x40] sm:$0xff] %v1868
        %1885 = vst [vmem:[#allocation2 + $0x48] sm:$0xff] %v1869
        %1886 = vst [vmem:[#allocation2 + $0x50] sm:$0xff] %v1870
        %1887 = vst [vmem:[#allocation2 + $0x58] sm:$0xff] %v1871
        %1888 = vst [vmem:[#allocation2 + $0x60] sm:$0xff] %v1872
        %1889 = vst [vmem:[#allocation2 + $0x68] sm:$0xff] %v1873
        %1890 = vst [vmem:[#allocation2 + $0x70] sm:$0xff] %v1874
        %1891 = vst [vmem:[#allocation2 + $0x78] sm:$0xff] %v1875
        %v1892 = vld [vmem:[#allocation2] sm:$0xff]
        %v1893 = vld [vmem:[#allocation2 + $0x8] sm:$0xff]
        %v1894 = vld [vmem:[#allocation2 + $0x10] sm:$0xff]
        %v1895 = vld [vmem:[#allocation2 + $0x18] sm:$0xff]
        %v1896 = vld [vmem:[#allocation2 + $0x20] sm:$0xff]
        %v1897 = vld [vmem:[#allocation2 + $0x28] sm:$0xff]
        %v1898 = vld [vmem:[#allocation2 + $0x30] sm:$0xff]
        %v1899 = vld [vmem:[#allocation2 + $0x38] sm:$0xff]
        %v1900 = vld [vmem:[#allocation2 + $0x40] sm:$0xff]
        %v1901 = vld [vmem:[#allocation2 + $0x48] sm:$0xff]
        %v1902 = vld [vmem:[#allocation2 + $0x50] sm:$0xff]
        %v1903 = vld [vmem:[#allocation2 + $0x58] sm:$0xff]
        %v1904 = vld [vmem:[#allocation2 + $0x60] sm:$0xff]
        %v1905 = vld [vmem:[#allocation2 + $0x68] sm:$0xff]
        %v1906 = vld [vmem:[#allocation2 + $0x70] sm:$0xff]
        %v1907 = vld [vmem:[#allocation2 + $0x78] sm:$0xff]
        %v1908 = vpack.c.bf16 %v1893, %v1892
        %v1909 = vpack.c.bf16 %v1895, %v1894
        %v1910 = vpack.c.bf16 %v1897, %v1896
        %v1911 = vpack.c.bf16 %v1899, %v1898
        %v1912 = vpack.c.bf16 %v1901, %v1900
        %v1913 = vpack.c.bf16 %v1903, %v1902
        %v1914 = vpack.c.bf16 %v1905, %v1904
        %v1915 = vpack.c.bf16 %v1907, %v1906
        %v1916 = vld [vmem:[#allocation9] sm:$0xf]
        %v1917 = vld [vmem:[#allocation9 + $0x4] sm:$0xf]
        %v1918 = vld [vmem:[#allocation9 + $0x8] sm:$0xf]
        %v1919 = vld [vmem:[#allocation9 + $0xc] sm:$0xf]
        %v1920 = vld [vmem:[#allocation9 + $0x10] sm:$0xf]
        %v1921 = vld [vmem:[#allocation9 + $0x14] sm:$0xf]
        %v1922 = vld [vmem:[#allocation9 + $0x18] sm:$0xf]
        %v1923 = vld [vmem:[#allocation9 + $0x1c] sm:$0xf]
        %v1924 = vld [vmem:[#allocation9 + $0x20] sm:$0xf]
        %v1925 = vld [vmem:[#allocation9 + $0x24] sm:$0xf]
        %v1926 = vld [vmem:[#allocation9 + $0x28] sm:$0xf]
        %v1927 = vld [vmem:[#allocation9 + $0x2c] sm:$0xf]
        %v1928 = vld [vmem:[#allocation9 + $0x30] sm:$0xf]
        %v1929 = vld [vmem:[#allocation9 + $0x34] sm:$0xf]
        %v1930 = vld [vmem:[#allocation9 + $0x38] sm:$0xf]
        %v1931 = vld [vmem:[#allocation9 + $0x3c] sm:$0xf]
        %v1932 = vld [vmem:[%s6] sm:$0x1]
        %v1934 = vlaneseq
        %v1935 = vshrl.u32 %v1934, 7
        %v1936 = vsub.s32 0, %v1935
        %v1937 = vrot.slane %v1932, %v1936
        %v1955 = vunpack.c.l.b16 %v1916
        %v1956 = vunpack.c.l.b16 %v1917
        %v1957 = vunpack.c.l.b16 %v1918
        %v1958 = vunpack.c.l.b16 %v1919
        %v1959 = vunpack.c.l.b16 %v1920
        %v1960 = vunpack.c.l.b16 %v1921
        %v1961 = vunpack.c.l.b16 %v1922
        %v1962 = vunpack.c.l.b16 %v1923
        %v1963 = vunpack.c.l.b16 %v1924
        %v1964 = vunpack.c.l.b16 %v1925
        %v1965 = vunpack.c.l.b16 %v1926
        %v1966 = vunpack.c.l.b16 %v1927
        %v1967 = vunpack.c.l.b16 %v1928
        %v1968 = vunpack.c.l.b16 %v1929
        %v1969 = vunpack.c.l.b16 %v1930
        %v1970 = vunpack.c.l.b16 %v1931
        %v1971 = vpack.c.b16 %v1956, %v1955
        %v1972 = vpack.c.b16 %v1958, %v1957
        %v1973 = vpack.c.b16 %v1960, %v1959
        %v1974 = vpack.c.b16 %v1962, %v1961
        %v1975 = vpack.c.b16 %v1964, %v1963
        %v1976 = vpack.c.b16 %v1966, %v1965
        %v1977 = vpack.c.b16 %v1968, %v1967
        %v1978 = vpack.c.b16 %v1970, %v1969
        %1987 = vmatprep.subr.bf16.mxu0 0
        %1988 = vmatpush1.bf16.msra.mxu0 %v1971
        %1989 = vmatprep.subr.bf16.mxu0 0
        %1990 = vmatpush1.bf16.msra.mxu0 %v1972
        %1991 = vmatprep.subr.bf16.mxu0 0
        %1992 = vmatpush1.bf16.msra.mxu0 %v1973
        %1993 = vmatprep.subr.bf16.mxu0 0
        %1994 = vmatpush1.bf16.msra.mxu0 %v1974
        %1995 = vmatprep.subr.bf16.mxu0 0
        %1996 = vmatpush1.bf16.msra.mxu0 %v1975
        %1997 = vmatprep.subr.bf16.mxu0 0
        %1998 = vmatpush1.bf16.msra.mxu0 %v1976
        %1999 = vmatprep.subr.bf16.mxu0 0
        %2000 = vmatpush1.bf16.msra.mxu0 %v1977
        %2001 = vmatprep.subr.bf16.mxu0 0
        %2002 = vmatpush1.bf16.msra.mxu0 %v1978
        %2003 = vmatprep.subr.bf16.mxu0 0
        %2004 = vmatpush1.bf16.msra.mxu0 0
        %2005 = vmatprep.subr.bf16.mxu0 0
        %2006 = vmatpush1.bf16.msra.mxu0 0
        %2007 = vmatprep.subr.bf16.mxu0 0
        %2008 = vmatpush1.bf16.msra.mxu0 0
        %2009 = vmatprep.subr.bf16.mxu0 0
        %2010 = vmatpush1.bf16.msra.mxu0 0
        %2011 = vmatprep.subr.bf16.mxu0 0
        %2012 = vmatpush1.bf16.msra.mxu0 0
        %2013 = vmatprep.subr.bf16.mxu0 0
        %2014 = vmatpush1.bf16.msra.mxu0 0
        %2015 = vmatprep.subr.bf16.mxu0 0
        %2016 = vmatpush1.bf16.msra.mxu0 0
        %2017 = vmatprep.subr.bf16.mxu0 0
        %2018 = vmatpush1.bf16.msra.mxu0 0
        %2019 = vmatprep.mubr.bf16.mxu0 0
        %2020 = vmatmul.mubr.bf16.gmra.mrb[0].mxu0 %v1908
        %v2021 = vpop.f32.mrb[0].mxu0
        %v2022 = vadd.f32 %v1937, %v2021
        %v2023 = vpop.f32.mrb[0].mxu0
        %v2024 = vpop.f32.mrb[0].mxu0
        %v2025 = vadd.f32 %v1937, %v2024
        %v2026 = vpop.f32.mrb[0].mxu0
        %2027 = vmatprep.mubr.bf16.mxu0 0
        %2028 = vmatmul.mubr.bf16.gmra.mrb[0].mxu0 %v1909
        %v2029 = vpop.f32.mrb[0].mxu0
        %v2030 = vadd.f32 %v1937, %v2029
        %v2031 = vpop.f32.mrb[0].mxu0
        %v2032 = vpop.f32.mrb[0].mxu0
        %v2033 = vadd.f32 %v1937, %v2032
        %v2034 = vpop.f32.mrb[0].mxu0
        %2035 = vmatprep.mubr.bf16.mxu0 0
        %2036 = vmatmul.mubr.bf16.gmra.mrb[0].mxu0 %v1910
        %v2037 = vpop.f32.mrb[0].mxu0
        %v2038 = vadd.f32 %v1937, %v2037
        %v2039 = vpop.f32.mrb[0].mxu0
        %v2040 = vpop.f32.mrb[0].mxu0
        %v2041 = vadd.f32 %v1937, %v2040
        %v2042 = vpop.f32.mrb[0].mxu0
        %2043 = vmatprep.mubr.bf16.mxu0 0
        %2044 = vmatmul.mubr.bf16.gmra.mrb[0].mxu0 %v1911
        %v2045 = vpop.f32.mrb[0].mxu0
        %v2046 = vadd.f32 %v1937, %v2045
        %v2047 = vpop.f32.mrb[0].mxu0
        %v2048 = vpop.f32.mrb[0].mxu0
        %v2049 = vadd.f32 %v1937, %v2048
        %v2050 = vpop.f32.mrb[0].mxu0
        %2051 = vmatprep.mubr.bf16.mxu0 0
        %2052 = vmatmul.mubr.bf16.gmra.mrb[0].mxu0 %v1912
        %v2053 = vpop.f32.mrb[0].mxu0
        %v2054 = vadd.f32 %v1937, %v2053
        %v2055 = vpop.f32.mrb[0].mxu0
        %v2056 = vpop.f32.mrb[0].mxu0
        %v2057 = vadd.f32 %v1937, %v2056
        %v2058 = vpop.f32.mrb[0].mxu0
        %2059 = vmatprep.mubr.bf16.mxu0 0
        %2060 = vmatmul.mubr.bf16.gmra.mrb[0].mxu0 %v1913
        %v2061 = vpop.f32.mrb[0].mxu0
        %v2062 = vadd.f32 %v1937, %v2061
        %v2063 = vpop.f32.mrb[0].mxu0
        %v2064 = vpop.f32.mrb[0].mxu0
        %v2065 = vadd.f32 %v1937, %v2064
        %v2066 = vpop.f32.mrb[0].mxu0
        %2067 = vmatprep.mubr.bf16.mxu0 0
        %2068 = vmatmul.mubr.bf16.gmra.mrb[0].mxu0 %v1914
        %v2069 = vpop.f32.mrb[0].mxu0
        %v2070 = vadd.f32 %v1937, %v2069
        %v2071 = vpop.f32.mrb[0].mxu0
        %v2072 = vpop.f32.mrb[0].mxu0
        %v2073 = vadd.f32 %v1937, %v2072
        %v2074 = vpop.f32.mrb[0].mxu0
        %2075 = vmatprep.mubr.bf16.mxu0 0
        %2076 = vmatmul.mubr.bf16.gmra.mrb[0].mxu0 %v1915
        %v2077 = vpop.f32.mrb[0].mxu0
        %v2078 = vadd.f32 %v1937, %v2077
        %v2079 = vpop.f32.mrb[0].mxu0
        %v2080 = vpop.f32.mrb[0].mxu0
        %v2081 = vadd.f32 %v1937, %v2080
        %v2082 = vpop.f32.mrb[0].mxu0
        %2083 = vdwg.mxu0
        %2084 = vst [vmem:[%s341] sm:$0xff] %v2022
        %2085 = vst [vmem:[%s341 + $0x8] sm:$0xff] %v2025
        %2086 = vst [vmem:[%s341 + $0x10] sm:$0xff] %v2030
        %2087 = vst [vmem:[%s341 + $0x18] sm:$0xff] %v2033
        %2088 = vst [vmem:[%s341 + $0x20] sm:$0xff] %v2038
        %2089 = vst [vmem:[%s341 + $0x28] sm:$0xff] %v2041
        %2090 = vst [vmem:[%s341 + $0x30] sm:$0xff] %v2046
        %2091 = vst [vmem:[%s341 + $0x38] sm:$0xff] %v2049
        %2092 = vst [vmem:[%s341 + $0x40] sm:$0xff] %v2054
        %2093 = vst [vmem:[%s341 + $0x48] sm:$0xff] %v2057
        %2094 = vst [vmem:[%s341 + $0x50] sm:$0xff] %v2062
        %2095 = vst [vmem:[%s341 + $0x58] sm:$0xff] %v2065
        %2096 = vst [vmem:[%s341 + $0x60] sm:$0xff] %v2070
        %2097 = vst [vmem:[%s341 + $0x68] sm:$0xff] %v2073
        %2098 = vst [vmem:[%s341 + $0x70] sm:$0xff] %v2078
        %2099 = vst [vmem:[%s341 + $0x78] sm:$0xff] %v2081
        %s2100 = sand.u32 %s186, 1
        %s2101 = scalar_lea.sflag [#allocation5], %s2100
        %s2102 = sand.u32 %s186, 1
        %s2103 = smul.addr %s2102, 128
        %s2104 = scalar_lea.vmem [#allocation11], %s2103
        // Predicated region
        $region65: #{tpu_custom_call.1} parent=47 // pred_check
          %p2105 = pneg %p196
        $region66: #{tpu_custom_call.1} parent=47 // pred_check_branch
          %2107 = sbr.rel (%p2105) target = $region68
        $region67: #{tpu_custom_call.1} parent=47 // pred_region
          %s2108 = smul.u32 16, %s26
          %s2110 = ssub.s32 2048, 2048
          %2111 = vsyncadd %s2101, %s2110
          %s2112 = smul.addr %s2108, 128
          %s2113 = scalar_lea.hbm %s7, %s2112
          %s2114 = sshll.u32 %s2104, 4
          %s2115 = int_to_ptr.vmem [resolvable:$true] %s2114
          %2120 = dma.vmem_to_hbm [thread:$0]  %s2115, 2048, %s2113, %s2101, 128, 128, 8
        $region68: #{tpu_custom_call.1} parent=47 // pred_fallthru
          _
      $region48: #{tpu_custom_call.1} parent=5 // pred_fallthru
        _
      %p2121 = scmp.le.s32.totalorder 2, %s21
      // Predicated region
      $region69: #{tpu_custom_call.1} parent=5 // pred_check
        %p2122 = pneg %p2121
      $region70: #{tpu_custom_call.1} parent=5 // pred_check_branch
        %2124 = sbr.rel (%p2122) target = $region72
      $region71: #{tpu_custom_call.1} parent=5 // pred_region
        %s2125 = ssub.s32 %s21, 2
        // Predicated region
        $region73: #{tpu_custom_call.1} parent=71 // pred_check
          %p2126 = pneg %p202
        $region74: #{tpu_custom_call.1} parent=71 // pred_check_branch
          %2128 = sbr.rel (%p2126) target = $region76
        $region75: #{tpu_custom_call.1} parent=71 // pred_region
          %s2129 = sand.u32 %s187, 1
          %s2130 = scalar_lea.sflag [#allocation5], %s2129
          %s2131 = sand.u32 %s187, 1
          %s2132 = smul.addr %s2131, 128
          %s2133 = scalar_lea.vmem [#allocation11], %s2132
          %2134 = dma.done %s2130, 2048
        $region76: #{tpu_custom_call.1} parent=71 // pred_fallthru
          _
      $region72: #{tpu_custom_call.1} parent=5 // pred_fallthru
        _
    $region6: #{tpu_custom_call.1} parent=1 // loop_footer
      %s25 = sadd.s32 1, %s21
    $region7: #{tpu_custom_call.1} parent=1 // loop_footer_branch
      %20 = sbr.rel target = $region3
    $region8: #{tpu_custom_call.1} parent=1 // loop_exit
      _
    %2135 = vsyncpa [#allocation4], 1
    %s2136 = scalar_lea.sflag [#allocation4], 1
    %2137 = vsyncpa %s2136, 1
    %2138 = vsyncpa [#allocation7], 1
    %2139 = vsyncpa [#allocation10], 1
    %2140 = vsyncpa [#allocation5], 1
    %s2141 = scalar_lea.sflag [#allocation5], 1
    %2142 = vsyncpa %s2141, 1

</llo_original>
